<compile_context>
chip_gen: v6e
topology: v6e:2x2x1
jax: 0.10.0
libtpu: 0.0.40
codegen_flags: <defaults>
</compile_context>

<pallas_src>
import functools

import jax
import jax.numpy as jnp
from jax.experimental import pallas as pl
from jax.experimental.pallas import tpu as pltpu
import numpy as np


def _round_up(v, m):
    return ((v + m - 1) // m) * m


def spatial_gate_kernel(x_ref, cw_ref, cb_ref, o_ref, pad_ref, *, H, W, OFF):
    # x_ref block: (Nb, C, H*W), lane-dense (last dim multiple of 128).
    Nb, C, HW = x_ref.shape
    LP = pad_ref.shape[-1]

    x = x_ref[...]                                  # (Nb, C, HW)

    # ---- ChannelPool: max / mean over the channel axis --------------------
    cmax = jnp.max(x, axis=1)                       # (Nb, HW)
    cmean = jnp.mean(x, axis=1)                     # (Nb, HW)

    # ---- Row-padded flat maps in VMEM scratch ------------------------------
    # Valid data sits at lane offset OFF (multiple of 128 -> aligned, unmasked
    # stores). The zero head/tail supply the conv's top/bottom zero padding.
    # The zero writes are aligned, tiny and unconditional, so the kernel stays
    # correct when the batch grid axis is sharded across cores ("parallel").
    pad_ref[:, :, 0:OFF] = jnp.zeros((2, Nb, OFF), jnp.float32)
    pad_ref[:, :, OFF + HW:LP] = jnp.zeros((2, Nb, LP - OFF - HW), jnp.float32)
    pad_ref[0, :, OFF:OFF + HW] = cmax
    pad_ref[1, :, OFF:OFF + HW] = cmean

    # Column index of every flat position (for masking the left/right
    # wrap-around that the flat row-major layout introduces).
    col = jax.lax.broadcasted_iota(jnp.int32, (Nb, HW), 1) % W

    # ---- 7x7 conv, 2 -> 1 channels -----------------------------------------
    # For each horizontal offset kj, the 2*7 vertical taps form an independent
    # partial sum (ILP across the 7 chains); the column mask is applied once
    # per kj; the partials are summed at the end.
    parts = []
    for kj in range(7):
        dj = kj - 3
        part = None
        for c in range(2):                          # 0: max map, 1: mean map
            for ki in range(7):
                start = OFF + (ki - 3) * W + dj     # static lane offset
                wgt = cw_ref[c * 49 + ki * 7 + kj]  # scalar from SMEM
                term = wgt * pad_ref[c, :, start:start + HW]
                part = term if part is None else part + term
        if dj != 0:
            valid = jnp.logical_and(col + dj >= 0, col + dj < W)
            part = jnp.where(valid, part, 0.0)
        parts.append(part)

    conv = parts[0]
    for p in parts[1:]:
        conv = conv + p
    conv = conv + cb_ref[0]                         # conv bias

    scale = jax.nn.sigmoid(conv)                    # (Nb, HW)

    # ---- Apply spatial gate; lane-dense output store -----------------------
    o_ref[...] = (x * scale[:, None, :]).astype(o_ref.dtype)


def spatial_gate_pallas(x, cw_flat, cb, *, max_block_n=8, vmem_budget_bytes=8 << 20):
    N, C, H, W = x.shape
    HW = H * W

    # 128-aligned lane offset of the valid region inside the row-padded scratch.
    OFF = _round_up(3 * W + 3, 128)
    LP = OFF + _round_up((H + 3) * W + 3, 128)

    # Largest batch block that divides N and fits a conservative VMEM budget
    # (2x double-buffered input + output blocks + conv scratch).
    per_sample_bytes = C * HW * 4
    nb = 1
    for cand in range(1, min(N, max_block_n) + 1):
        need = 4 * cand * per_sample_bytes + 2 * cand * LP * 4
        if N % cand == 0 and need <= vmem_budget_bytes:
            nb = cand

    vmem_limit = int(min(max(2 * (4 * nb * per_sample_bytes + 2 * nb * LP * 4),
                             8 << 20), 30 << 20))

    x_flat = x.reshape(N, C, HW)
    kernel = functools.partial(spatial_gate_kernel, H=H, W=W, OFF=OFF)

    out_flat = pl.pallas_call(
        kernel,
        out_shape=jax.ShapeDtypeStruct((N, C, HW), x.dtype),
        grid_spec=pltpu.PrefetchScalarGridSpec(
            num_scalar_prefetch=0,
            grid=(N // nb,),
            in_specs=[
                pl.BlockSpec((nb, C, HW), lambda n: (n, 0, 0)),      # x (flat)
                pl.BlockSpec(memory_space=pltpu.MemorySpace.SMEM),   # conv weights (98,)
                pl.BlockSpec(memory_space=pltpu.MemorySpace.SMEM),   # conv bias (1,)
            ],
            out_specs=pl.BlockSpec((nb, C, HW), lambda n: (n, 0, 0)),
            scratch_shapes=[pltpu.VMEM((2, nb, LP), jnp.float32)],
        ),
        compiler_params=pltpu.CompilerParams(
            dimension_semantics=("parallel",),
            vmem_limit_bytes=vmem_limit),
    )(x_flat, cw_flat, cb)

    return out_flat.reshape(N, C, H, W)


def spatial_gate_reference(x, cw_flat, cb):
    """Pure-JAX reference mirroring the PyTorch SpatialGate forward pass."""
    cmax = x.max(axis=1, keepdims=True)
    cmean = x.mean(axis=1, keepdims=True)
    comp = jnp.concatenate([cmax, cmean], axis=1)            # (N, 2, H, W)
    wconv = cw_flat.reshape(1, 2, 7, 7)
    conv = jax.lax.conv_general_dilated(
        comp, wconv, window_strides=(1, 1), padding=[(3, 3), (3, 3)],
        dimension_numbers=("NCHW", "OIHW", "NCHW")) + cb[0]
    return x * jax.nn.sigmoid(conv)


if __name__ == "__main__":
    N, C, H, W = 2, 4, 16, 16

    key = jax.random.PRNGKey(0)
    kx, kw, kb, kx2 = jax.random.split(key, 4)

    x = jax.random.normal(kx, (N, C, H, W), dtype=jnp.float32)
    cw_flat = 0.2 * jax.random.normal(kw, (2 * 7 * 7,), dtype=jnp.float32)  # Conv2d(2,1,7)
    cb = 0.1 * jax.random.normal(kb, (1,), dtype=jnp.float32)

    out = jax.block_until_ready(spatial_gate_pallas(x, cw_flat, cb))
    ref = jax.block_until_ready(spatial_gate_reference(x, cw_flat, cb))
    np.testing.assert_allclose(np.asarray(out), np.asarray(ref), rtol=1e-3, atol=1e-3)

    # Second config: multiple samples per block AND more than one grid step.
    x2 = jax.random.normal(kx2, (4, C, H, W), dtype=jnp.float32)
    out2 = jax.block_until_ready(spatial_gate_pallas(x2, cw_flat, cb, max_block_n=2))
    ref2 = jax.block_until_ready(spatial_gate_reference(x2, cw_flat, cb))
    np.testing.assert_allclose(np.asarray(out2), np.asarray(ref2), rtol=1e-3, atol=1e-3)

    print("KERNEL_OK")
</pallas_src>

<mosaic_0001>
module attributes {stable_mosaic.version = 11 : i64} {
  func.func @spatial_gate_kernel(%arg0: i32, %arg1: memref<2x4x256xf32, #tpu.memory_space<vmem>>, %arg2: memref<98xf32, #tpu.memory_space<smem>>, %arg3: memref<1xf32, #tpu.memory_space<smem>>, %arg4: memref<2x4x256xf32, #tpu.memory_space<vmem>>, %arg5: memref<2x2x512xf32, #tpu.memory_space<vmem>>) attributes {dimension_semantics = [#tpu.dimension_semantics<parallel>], iteration_bounds = array<i64: 1>, scalar_prefetch = 0 : i64, scratch_operands = 1 : i64, tpu.core_type = #tpu.core_type<tc>, window_params = [{transform_indices = @transform_0, window_bounds = array<i64: 2, 4, 256>}, {transform_indices = @transform_1, window_bounds = array<i64: 98>}, {transform_indices = @transform_2, window_bounds = array<i64: 1>}, {transform_indices = @transform_3, window_bounds = array<i64: 2, 4, 256>}]} {
    %c0 = arith.constant 0 : index
    %c0_0 = arith.constant 0 : index
    %c0_1 = arith.constant 0 : index
    %0 = vector.load %arg1[%c0, %c0_0, %c0_1] : memref<2x4x256xf32, #tpu.memory_space<vmem>>, vector<2x4x256xf32>
    %cst = arith.constant dense<0xFF800000> : vector<2x256xf32>
    %1 = vector.multi_reduction <maximumf>, %0, %cst [1] : vector<2x4x256xf32> to vector<2x256xf32>
    %cst_2 = arith.constant dense<0.000000e+00> : vector<2x256xf32>
    %2 = vector.multi_reduction <add>, %0, %cst_2 [1] : vector<2x4x256xf32> to vector<2x256xf32>
    %cst_3 = arith.constant 4.000000e+00 : f32
    %3 = vector.broadcast %cst_3 : f32 to vector<2x256xf32>
    %4 = arith.divf %2, %3 : vector<2x256xf32>
    %cst_4 = arith.constant 0.000000e+00 : f32
    %5 = vector.broadcast %cst_4 : f32 to vector<2x2x128xf32>
    %c0_5 = arith.constant 0 : index
    %c0_6 = arith.constant 0 : index
    %c0_7 = arith.constant 0 : index
    %6 = vector.load %arg5[%c0_5, %c0_6, %c0_7] : memref<2x2x512xf32, #tpu.memory_space<vmem>>, vector<2x2x128xf32>
    tpu.vector_store %arg5[%c0_5, %c0_6, %c0_7], %5 {strides = array<i32>} : memref<2x2x512xf32, #tpu.memory_space<vmem>>, vector<2x2x128xf32>,
    %cst_8 = arith.constant 0.000000e+00 : f32
    %7 = vector.broadcast %cst_8 : f32 to vector<2x2x128xf32>
    %c0_9 = arith.constant 0 : index
    %c0_10 = arith.constant 0 : index
    %c384 = arith.constant 384 : index
    %8 = vector.load %arg5[%c0_9, %c0_10, %c384] : memref<2x2x512xf32, #tpu.memory_space<vmem>>, vector<2x2x128xf32>
    tpu.vector_store %arg5[%c0_9, %c0_10, %c384], %7 {strides = array<i32>} : memref<2x2x512xf32, #tpu.memory_space<vmem>>, vector<2x2x128xf32>,
    %c0_11 = arith.constant 0 : index
    %c0_12 = arith.constant 0 : index
    %c128 = arith.constant 128 : index
    %9 = vector.load %arg5[%c0_11, %c0_12, %c128] : memref<2x2x512xf32, #tpu.memory_space<vmem>>, vector<1x2x256xf32>
    %10 = vector.shape_cast %9 : vector<1x2x256xf32> to vector<2x256xf32>
    %11 = vector.shape_cast %1 : vector<2x256xf32> to vector<1x2x256xf32>
    tpu.vector_store %arg5[%c0_11, %c0_12, %c128], %11 {strides = array<i32>} : memref<2x2x512xf32, #tpu.memory_space<vmem>>, vector<1x2x256xf32>,
    %c1 = arith.constant 1 : index
    %c0_13 = arith.constant 0 : index
    %c128_14 = arith.constant 128 : index
    %12 = vector.load %arg5[%c1, %c0_13, %c128_14] : memref<2x2x512xf32, #tpu.memory_space<vmem>>, vector<1x2x256xf32>
    %13 = vector.shape_cast %12 : vector<1x2x256xf32> to vector<2x256xf32>
    %14 = vector.shape_cast %4 : vector<2x256xf32> to vector<1x2x256xf32>
    tpu.vector_store %arg5[%c1, %c0_13, %c128_14], %14 {strides = array<i32>} : memref<2x2x512xf32, #tpu.memory_space<vmem>>, vector<1x2x256xf32>,
    %15 = tpu.iota {dimensions = array<i32: 1>} : vector<2x256xi32>
    %c16_i32 = arith.constant 16 : i32
    %c0_i32 = arith.constant 0 : i32
    %16 = arith.cmpi eq, %c16_i32, %c0_i32 : i32
    %c1_i32 = arith.constant 1 : i32
    %17 = arith.select %16, %c1_i32, %c16_i32 : i32
    %18 = vector.broadcast %17 : i32 to vector<2x256xi32>
    %19 = arith.remsi %15, %18 : vector<2x256xi32>
    %c0_i32_15 = arith.constant 0 : i32
    %20 = vector.broadcast %c0_i32_15 : i32 to vector<2x256xi32>
    %21 = arith.cmpi ne, %19, %20 : vector<2x256xi32>
    %c0_i32_16 = arith.constant 0 : i32
    %22 = vector.broadcast %c0_i32_16 : i32 to vector<2x256xi32>
    %23 = arith.cmpi slt, %19, %22 : vector<2x256xi32>
    %c0_i32_17 = arith.constant 0 : i32
    %24 = arith.cmpi slt, %17, %c0_i32_17 : i32
    %25 = vector.broadcast %24 : i1 to vector<2x256xi1>
    %26 = vector.broadcast %25 : vector<2x256xi1> to vector<2x256xi1>
    %27 = arith.xori %23, %26 : vector<2x256xi1>
    %28 = arith.andi %27, %21 : vector<2x256xi1>
    %29 = vector.broadcast %17 : i32 to vector<2x256xi32>
    %30 = arith.addi %19, %29 : vector<2x256xi32>
    %31 = arith.select %28, %30, %19 : vector<2x256xi1>, vector<2x256xi32>
    %c0_18 = arith.constant 0 : index
    %32 = memref.load %arg2[%c0_18] : memref<98xf32, #tpu.memory_space<smem>>
    %c0_19 = arith.constant 0 : index
    %c0_20 = arith.constant 0 : index
    %c77 = arith.constant 77 : index
    %33 = vector.load %arg5[%c0_19, %c0_20, %c77] : memref<2x2x512xf32, #tpu.memory_space<vmem>>, vector<1x2x256xf32>
    %34 = vector.shape_cast %33 : vector<1x2x256xf32> to vector<2x256xf32>
    %35 = vector.broadcast %32 : f32 to vector<2x256xf32>
    %36 = arith.mulf %35, %34 : vector<2x256xf32>
    %c7 = arith.constant 7 : index
    %37 = memref.load %arg2[%c7] : memref<98xf32, #tpu.memory_space<smem>>
    %c0_21 = arith.constant 0 : index
    %c0_22 = arith.constant 0 : index
    %c93 = arith.constant 93 : index
    %38 = vector.load %arg5[%c0_21, %c0_22, %c93] : memref<2x2x512xf32, #tpu.memory_space<vmem>>, vector<1x2x256xf32>
    %39 = vector.shape_cast %38 : vector<1x2x256xf32> to vector<2x256xf32>
    %40 = vector.broadcast %37 : f32 to vector<2x256xf32>
    %41 = arith.mulf %40, %39 : vector<2x256xf32>
    %42 = arith.addf %36, %41 : vector<2x256xf32>
    %c14 = arith.constant 14 : index
    %43 = memref.load %arg2[%c14] : memref<98xf32, #tpu.memory_space<smem>>
    %c0_23 = arith.constant 0 : index
    %c0_24 = arith.constant 0 : index
    %c109 = arith.constant 109 : index
    %44 = vector.load %arg5[%c0_23, %c0_24, %c109] : memref<2x2x512xf32, #tpu.memory_space<vmem>>, vector<1x2x256xf32>
    %45 = vector.shape_cast %44 : vector<1x2x256xf32> to vector<2x256xf32>
    %46 = vector.broadcast %43 : f32 to vector<2x256xf32>
    %47 = arith.mulf %46, %45 : vector<2x256xf32>
    %48 = arith.addf %42, %47 : vector<2x256xf32>
    %c21 = arith.constant 21 : index
    %49 = memref.load %arg2[%c21] : memref<98xf32, #tpu.memory_space<smem>>
    %c0_25 = arith.constant 0 : index
    %c0_26 = arith.constant 0 : index
    %c125 = arith.constant 125 : index
    %50 = vector.load %arg5[%c0_25, %c0_26, %c125] : memref<2x2x512xf32, #tpu.memory_space<vmem>>, vector<1x2x256xf32>
    %51 = vector.shape_cast %50 : vector<1x2x256xf32> to vector<2x256xf32>
    %52 = vector.broadcast %49 : f32 to vector<2x256xf32>
    %53 = arith.mulf %52, %51 : vector<2x256xf32>
    %54 = arith.addf %48, %53 : vector<2x256xf32>
    %c28 = arith.constant 28 : index
    %55 = memref.load %arg2[%c28] : memref<98xf32, #tpu.memory_space<smem>>
    %c0_27 = arith.constant 0 : index
    %c0_28 = arith.constant 0 : index
    %c141 = arith.constant 141 : index
    %56 = vector.load %arg5[%c0_27, %c0_28, %c141] : memref<2x2x512xf32, #tpu.memory_space<vmem>>, vector<1x2x256xf32>
    %57 = vector.shape_cast %56 : vector<1x2x256xf32> to vector<2x256xf32>
    %58 = vector.broadcast %55 : f32 to vector<2x256xf32>
    %59 = arith.mulf %58, %57 : vector<2x256xf32>
    %60 = arith.addf %54, %59 : vector<2x256xf32>
    %c35 = arith.constant 35 : index
    %61 = memref.load %arg2[%c35] : memref<98xf32, #tpu.memory_space<smem>>
    %c0_29 = arith.constant 0 : index
    %c0_30 = arith.constant 0 : index
    %c157 = arith.constant 157 : index
    %62 = vector.load %arg5[%c0_29, %c0_30, %c157] : memref<2x2x512xf32, #tpu.memory_space<vmem>>, vector<1x2x256xf32>
    %63 = vector.shape_cast %62 : vector<1x2x256xf32> to vector<2x256xf32>
    %64 = vector.broadcast %61 : f32 to vector<2x256xf32>
    %65 = arith.mulf %64, %63 : vector<2x256xf32>
    %66 = arith.addf %60, %65 : vector<2x256xf32>
    %c42 = arith.constant 42 : index
    %67 = memref.load %arg2[%c42] : memref<98xf32, #tpu.memory_space<smem>>
    %c0_31 = arith.constant 0 : index
    %c0_32 = arith.constant 0 : index
    %c173 = arith.constant 173 : index
    %68 = vector.load %arg5[%c0_31, %c0_32, %c173] : memref<2x2x512xf32, #tpu.memory_space<vmem>>, vector<1x2x256xf32>
    %69 = vector.shape_cast %68 : vector<1x2x256xf32> to vector<2x256xf32>
    %70 = vector.broadcast %67 : f32 to vector<2x256xf32>
    %71 = arith.mulf %70, %69 : vector<2x256xf32>
    %72 = arith.addf %66, %71 : vector<2x256xf32>
    %c49 = arith.constant 49 : index
    %73 = memref.load %arg2[%c49] : memref<98xf32, #tpu.memory_space<smem>>
    %c1_33 = arith.constant 1 : index
    %c0_34 = arith.constant 0 : index
    %c77_35 = arith.constant 77 : index
    %74 = vector.load %arg5[%c1_33, %c0_34, %c77_35] : memref<2x2x512xf32, #tpu.memory_space<vmem>>, vector<1x2x256xf32>
    %75 = vector.shape_cast %74 : vector<1x2x256xf32> to vector<2x256xf32>
    %76 = vector.broadcast %73 : f32 to vector<2x256xf32>
    %77 = arith.mulf %76, %75 : vector<2x256xf32>
    %78 = arith.addf %72, %77 : vector<2x256xf32>
    %c56 = arith.constant 56 : index
    %79 = memref.load %arg2[%c56] : memref<98xf32, #tpu.memory_space<smem>>
    %c1_36 = arith.constant 1 : index
    %c0_37 = arith.constant 0 : index
    %c93_38 = arith.constant 93 : index
    %80 = vector.load %arg5[%c1_36, %c0_37, %c93_38] : memref<2x2x512xf32, #tpu.memory_space<vmem>>, vector<1x2x256xf32>
    %81 = vector.shape_cast %80 : vector<1x2x256xf32> to vector<2x256xf32>
    %82 = vector.broadcast %79 : f32 to vector<2x256xf32>
    %83 = arith.mulf %82, %81 : vector<2x256xf32>
    %84 = arith.addf %78, %83 : vector<2x256xf32>
    %c63 = arith.constant 63 : index
    %85 = memref.load %arg2[%c63] : memref<98xf32, #tpu.memory_space<smem>>
    %c1_39 = arith.constant 1 : index
    %c0_40 = arith.constant 0 : index
    %c109_41 = arith.constant 109 : index
    %86 = vector.load %arg5[%c1_39, %c0_40, %c109_41] : memref<2x2x512xf32, #tpu.memory_space<vmem>>, vector<1x2x256xf32>
    %87 = vector.shape_cast %86 : vector<1x2x256xf32> to vector<2x256xf32>
    %88 = vector.broadcast %85 : f32 to vector<2x256xf32>
    %89 = arith.mulf %88, %87 : vector<2x256xf32>
    %90 = arith.addf %84, %89 : vector<2x256xf32>
    %c70 = arith.constant 70 : index
    %91 = memref.load %arg2[%c70] : memref<98xf32, #tpu.memory_space<smem>>
    %c1_42 = arith.constant 1 : index
    %c0_43 = arith.constant 0 : index
    %c125_44 = arith.constant 125 : index
    %92 = vector.load %arg5[%c1_42, %c0_43, %c125_44] : memref<2x2x512xf32, #tpu.memory_space<vmem>>, vector<1x2x256xf32>
    %93 = vector.shape_cast %92 : vector<1x2x256xf32> to vector<2x256xf32>
    %94 = vector.broadcast %91 : f32 to vector<2x256xf32>
    %95 = arith.mulf %94, %93 : vector<2x256xf32>
    %96 = arith.addf %90, %95 : vector<2x256xf32>
    %c77_45 = arith.constant 77 : index
    %97 = memref.load %arg2[%c77_45] : memref<98xf32, #tpu.memory_space<smem>>
    %c1_46 = arith.constant 1 : index
    %c0_47 = arith.constant 0 : index
    %c141_48 = arith.constant 141 : index
    %98 = vector.load %arg5[%c1_46, %c0_47, %c141_48] : memref<2x2x512xf32, #tpu.memory_space<vmem>>, vector<1x2x256xf32>
    %99 = vector.shape_cast %98 : vector<1x2x256xf32> to vector<2x256xf32>
    %100 = vector.broadcast %97 : f32 to vector<2x256xf32>
    %101 = arith.mulf %100, %99 : vector<2x256xf32>
    %102 = arith.addf %96, %101 : vector<2x256xf32>
    %c84 = arith.constant 84 : index
    %103 = memref.load %arg2[%c84] : memref<98xf32, #tpu.memory_space<smem>>
    %c1_49 = arith.constant 1 : index
    %c0_50 = arith.constant 0 : index
    %c157_51 = arith.constant 157 : index
    %104 = vector.load %arg5[%c1_49, %c0_50, %c157_51] : memref<2x2x512xf32, #tpu.memory_space<vmem>>, vector<1x2x256xf32>
    %105 = vector.shape_cast %104 : vector<1x2x256xf32> to vector<2x256xf32>
    %106 = vector.broadcast %103 : f32 to vector<2x256xf32>
    %107 = arith.mulf %106, %105 : vector<2x256xf32>
    %108 = arith.addf %102, %107 : vector<2x256xf32>
    %c91 = arith.constant 91 : index
    %109 = memref.load %arg2[%c91] : memref<98xf32, #tpu.memory_space<smem>>
    %c1_52 = arith.constant 1 : index
    %c0_53 = arith.constant 0 : index
    %c173_54 = arith.constant 173 : index
    %110 = vector.load %arg5[%c1_52, %c0_53, %c173_54] : memref<2x2x512xf32, #tpu.memory_space<vmem>>, vector<1x2x256xf32>
    %111 = vector.shape_cast %110 : vector<1x2x256xf32> to vector<2x256xf32>
    %112 = vector.broadcast %109 : f32 to vector<2x256xf32>
    %113 = arith.mulf %112, %111 : vector<2x256xf32>
    %114 = arith.addf %108, %113 : vector<2x256xf32>
    %c-3_i32 = arith.constant -3 : i32
    %115 = vector.broadcast %c-3_i32 : i32 to vector<2x256xi32>
    %116 = arith.addi %31, %115 : vector<2x256xi32>
    %c0_i32_55 = arith.constant 0 : i32
    %117 = vector.broadcast %c0_i32_55 : i32 to vector<2x256xi32>
    %118 = arith.cmpi sge, %116, %117 : vector<2x256xi32>
    %c-3_i32_56 = arith.constant -3 : i32
    %119 = vector.broadcast %c-3_i32_56 : i32 to vector<2x256xi32>
    %120 = arith.addi %31, %119 : vector<2x256xi32>
    %c16_i32_57 = arith.constant 16 : i32
    %121 = vector.broadcast %c16_i32_57 : i32 to vector<2x256xi32>
    %122 = arith.cmpi slt, %120, %121 : vector<2x256xi32>
    %123 = arith.andi %118, %122 : vector<2x256xi1>
    %cst_58 = arith.constant 0.000000e+00 : f32
    %124 = vector.broadcast %cst_58 : f32 to vector<2x256xf32>
    %125 = arith.select %123, %114, %124 : vector<2x256xi1>, vector<2x256xf32>
    %c1_59 = arith.constant 1 : index
    %126 = memref.load %arg2[%c1_59] : memref<98xf32, #tpu.memory_space<smem>>
    %c0_60 = arith.constant 0 : index
    %c0_61 = arith.constant 0 : index
    %c78 = arith.constant 78 : index
    %127 = vector.load %arg5[%c0_60, %c0_61, %c78] : memref<2x2x512xf32, #tpu.memory_space<vmem>>, vector<1x2x256xf32>
    %128 = vector.shape_cast %127 : vector<1x2x256xf32> to vector<2x256xf32>
    %129 = vector.broadcast %126 : f32 to vector<2x256xf32>
    %130 = arith.mulf %129, %128 : vector<2x256xf32>
    %c8 = arith.constant 8 : index
    %131 = memref.load %arg2[%c8] : memref<98xf32, #tpu.memory_space<smem>>
    %c0_62 = arith.constant 0 : index
    %c0_63 = arith.constant 0 : index
    %c94 = arith.constant 94 : index
    %132 = vector.load %arg5[%c0_62, %c0_63, %c94] : memref<2x2x512xf32, #tpu.memory_space<vmem>>, vector<1x2x256xf32>
    %133 = vector.shape_cast %132 : vector<1x2x256xf32> to vector<2x256xf32>
    %134 = vector.broadcast %131 : f32 to vector<2x256xf32>
    %135 = arith.mulf %134, %133 : vector<2x256xf32>
    %136 = arith.addf %130, %135 : vector<2x256xf32>
    %c15 = arith.constant 15 : index
    %137 = memref.load %arg2[%c15] : memref<98xf32, #tpu.memory_space<smem>>
    %c0_64 = arith.constant 0 : index
    %c0_65 = arith.constant 0 : index
    %c110 = arith.constant 110 : index
    %138 = vector.load %arg5[%c0_64, %c0_65, %c110] : memref<2x2x512xf32, #tpu.memory_space<vmem>>, vector<1x2x256xf32>
    %139 = vector.shape_cast %138 : vector<1x2x256xf32> to vector<2x256xf32>
    %140 = vector.broadcast %137 : f32 to vector<2x256xf32>
    %141 = arith.mulf %140, %139 : vector<2x256xf32>
    %142 = arith.addf %136, %141 : vector<2x256xf32>
    %c22 = arith.constant 22 : index
    %143 = memref.load %arg2[%c22] : memref<98xf32, #tpu.memory_space<smem>>
    %c0_66 = arith.constant 0 : index
    %c0_67 = arith.constant 0 : index
    %c126 = arith.constant 126 : index
    %144 = vector.load %arg5[%c0_66, %c0_67, %c126] : memref<2x2x512xf32, #tpu.memory_space<vmem>>, vector<1x2x256xf32>
    %145 = vector.shape_cast %144 : vector<1x2x256xf32> to vector<2x256xf32>
    %146 = vector.broadcast %143 : f32 to vector<2x256xf32>
    %147 = arith.mulf %146, %145 : vector<2x256xf32>
    %148 = arith.addf %142, %147 : vector<2x256xf32>
    %c29 = arith.constant 29 : index
    %149 = memref.load %arg2[%c29] : memref<98xf32, #tpu.memory_space<smem>>
    %c0_68 = arith.constant 0 : index
    %c0_69 = arith.constant 0 : index
    %c142 = arith.constant 142 : index
    %150 = vector.load %arg5[%c0_68, %c0_69, %c142] : memref<2x2x512xf32, #tpu.memory_space<vmem>>, vector<1x2x256xf32>
    %151 = vector.shape_cast %150 : vector<1x2x256xf32> to vector<2x256xf32>
    %152 = vector.broadcast %149 : f32 to vector<2x256xf32>
    %153 = arith.mulf %152, %151 : vector<2x256xf32>
    %154 = arith.addf %148, %153 : vector<2x256xf32>
    %c36 = arith.constant 36 : index
    %155 = memref.load %arg2[%c36] : memref<98xf32, #tpu.memory_space<smem>>
    %c0_70 = arith.constant 0 : index
    %c0_71 = arith.constant 0 : index
    %c158 = arith.constant 158 : index
    %156 = vector.load %arg5[%c0_70, %c0_71, %c158] : memref<2x2x512xf32, #tpu.memory_space<vmem>>, vector<1x2x256xf32>
    %157 = vector.shape_cast %156 : vector<1x2x256xf32> to vector<2x256xf32>
    %158 = vector.broadcast %155 : f32 to vector<2x256xf32>
    %159 = arith.mulf %158, %157 : vector<2x256xf32>
    %160 = arith.addf %154, %159 : vector<2x256xf32>
    %c43 = arith.constant 43 : index
    %161 = memref.load %arg2[%c43] : memref<98xf32, #tpu.memory_space<smem>>
    %c0_72 = arith.constant 0 : index
    %c0_73 = arith.constant 0 : index
    %c174 = arith.constant 174 : index
    %162 = vector.load %arg5[%c0_72, %c0_73, %c174] : memref<2x2x512xf32, #tpu.memory_space<vmem>>, vector<1x2x256xf32>
    %163 = vector.shape_cast %162 : vector<1x2x256xf32> to vector<2x256xf32>
    %164 = vector.broadcast %161 : f32 to vector<2x256xf32>
    %165 = arith.mulf %164, %163 : vector<2x256xf32>
    %166 = arith.addf %160, %165 : vector<2x256xf32>
    %c50 = arith.constant 50 : index
    %167 = memref.load %arg2[%c50] : memref<98xf32, #tpu.memory_space<smem>>
    %c1_74 = arith.constant 1 : index
    %c0_75 = arith.constant 0 : index
    %c78_76 = arith.constant 78 : index
    %168 = vector.load %arg5[%c1_74, %c0_75, %c78_76] : memref<2x2x512xf32, #tpu.memory_space<vmem>>, vector<1x2x256xf32>
    %169 = vector.shape_cast %168 : vector<1x2x256xf32> to vector<2x256xf32>
    %170 = vector.broadcast %167 : f32 to vector<2x256xf32>
    %171 = arith.mulf %170, %169 : vector<2x256xf32>
    %172 = arith.addf %166, %171 : vector<2x256xf32>
    %c57 = arith.constant 57 : index
    %173 = memref.load %arg2[%c57] : memref<98xf32, #tpu.memory_space<smem>>
    %c1_77 = arith.constant 1 : index
    %c0_78 = arith.constant 0 : index
    %c94_79 = arith.constant 94 : index
    %174 = vector.load %arg5[%c1_77, %c0_78, %c94_79] : memref<2x2x512xf32, #tpu.memory_space<vmem>>, vector<1x2x256xf32>
    %175 = vector.shape_cast %174 : vector<1x2x256xf32> to vector<2x256xf32>
    %176 = vector.broadcast %173 : f32 to vector<2x256xf32>
    %177 = arith.mulf %176, %175 : vector<2x256xf32>
    %178 = arith.addf %172, %177 : vector<2x256xf32>
    %c64 = arith.constant 64 : index
    %179 = memref.load %arg2[%c64] : memref<98xf32, #tpu.memory_space<smem>>
    %c1_80 = arith.constant 1 : index
    %c0_81 = arith.constant 0 : index
    %c110_82 = arith.constant 110 : index
    %180 = vector.load %arg5[%c1_80, %c0_81, %c110_82] : memref<2x2x512xf32, #tpu.memory_space<vmem>>, vector<1x2x256xf32>
    %181 = vector.shape_cast %180 : vector<1x2x256xf32> to vector<2x256xf32>
    %182 = vector.broadcast %179 : f32 to vector<2x256xf32>
    %183 = arith.mulf %182, %181 : vector<2x256xf32>
    %184 = arith.addf %178, %183 : vector<2x256xf32>
    %c71 = arith.constant 71 : index
    %185 = memref.load %arg2[%c71] : memref<98xf32, #tpu.memory_space<smem>>
    %c1_83 = arith.constant 1 : index
    %c0_84 = arith.constant 0 : index
    %c126_85 = arith.constant 126 : index
    %186 = vector.load %arg5[%c1_83, %c0_84, %c126_85] : memref<2x2x512xf32, #tpu.memory_space<vmem>>, vector<1x2x256xf32>
    %187 = vector.shape_cast %186 : vector<1x2x256xf32> to vector<2x256xf32>
    %188 = vector.broadcast %185 : f32 to vector<2x256xf32>
    %189 = arith.mulf %188, %187 : vector<2x256xf32>
    %190 = arith.addf %184, %189 : vector<2x256xf32>
    %c78_86 = arith.constant 78 : index
    %191 = memref.load %arg2[%c78_86] : memref<98xf32, #tpu.memory_space<smem>>
    %c1_87 = arith.constant 1 : index
    %c0_88 = arith.constant 0 : index
    %c142_89 = arith.constant 142 : index
    %192 = vector.load %arg5[%c1_87, %c0_88, %c142_89] : memref<2x2x512xf32, #tpu.memory_space<vmem>>, vector<1x2x256xf32>
    %193 = vector.shape_cast %192 : vector<1x2x256xf32> to vector<2x256xf32>
    %194 = vector.broadcast %191 : f32 to vector<2x256xf32>
    %195 = arith.mulf %194, %193 : vector<2x256xf32>
    %196 = arith.addf %190, %195 : vector<2x256xf32>
    %c85 = arith.constant 85 : index
    %197 = memref.load %arg2[%c85] : memref<98xf32, #tpu.memory_space<smem>>
    %c1_90 = arith.constant 1 : index
    %c0_91 = arith.constant 0 : index
    %c158_92 = arith.constant 158 : index
    %198 = vector.load %arg5[%c1_90, %c0_91, %c158_92] : memref<2x2x512xf32, #tpu.memory_space<vmem>>, vector<1x2x256xf32>
    %199 = vector.shape_cast %198 : vector<1x2x256xf32> to vector<2x256xf32>
    %200 = vector.broadcast %197 : f32 to vector<2x256xf32>
    %201 = arith.mulf %200, %199 : vector<2x256xf32>
    %202 = arith.addf %196, %201 : vector<2x256xf32>
    %c92 = arith.constant 92 : index
    %203 = memref.load %arg2[%c92] : memref<98xf32, #tpu.memory_space<smem>>
    %c1_93 = arith.constant 1 : index
    %c0_94 = arith.constant 0 : index
    %c174_95 = arith.constant 174 : index
    %204 = vector.load %arg5[%c1_93, %c0_94, %c174_95] : memref<2x2x512xf32, #tpu.memory_space<vmem>>, vector<1x2x256xf32>
    %205 = vector.shape_cast %204 : vector<1x2x256xf32> to vector<2x256xf32>
    %206 = vector.broadcast %203 : f32 to vector<2x256xf32>
    %207 = arith.mulf %206, %205 : vector<2x256xf32>
    %208 = arith.addf %202, %207 : vector<2x256xf32>
    %c-2_i32 = arith.constant -2 : i32
    %209 = vector.broadcast %c-2_i32 : i32 to vector<2x256xi32>
    %210 = arith.addi %31, %209 : vector<2x256xi32>
    %c0_i32_96 = arith.constant 0 : i32
    %211 = vector.broadcast %c0_i32_96 : i32 to vector<2x256xi32>
    %212 = arith.cmpi sge, %210, %211 : vector<2x256xi32>
    %c-2_i32_97 = arith.constant -2 : i32
    %213 = vector.broadcast %c-2_i32_97 : i32 to vector<2x256xi32>
    %214 = arith.addi %31, %213 : vector<2x256xi32>
    %c16_i32_98 = arith.constant 16 : i32
    %215 = vector.broadcast %c16_i32_98 : i32 to vector<2x256xi32>
    %216 = arith.cmpi slt, %214, %215 : vector<2x256xi32>
    %217 = arith.andi %212, %216 : vector<2x256xi1>
    %cst_99 = arith.constant 0.000000e+00 : f32
    %218 = vector.broadcast %cst_99 : f32 to vector<2x256xf32>
    %219 = arith.select %217, %208, %218 : vector<2x256xi1>, vector<2x256xf32>
    %c2 = arith.constant 2 : index
    %220 = memref.load %arg2[%c2] : memref<98xf32, #tpu.memory_space<smem>>
    %c0_100 = arith.constant 0 : index
    %c0_101 = arith.constant 0 : index
    %c79 = arith.constant 79 : index
    %221 = vector.load %arg5[%c0_100, %c0_101, %c79] : memref<2x2x512xf32, #tpu.memory_space<vmem>>, vector<1x2x256xf32>
    %222 = vector.shape_cast %221 : vector<1x2x256xf32> to vector<2x256xf32>
    %223 = vector.broadcast %220 : f32 to vector<2x256xf32>
    %224 = arith.mulf %223, %222 : vector<2x256xf32>
    %c9 = arith.constant 9 : index
    %225 = memref.load %arg2[%c9] : memref<98xf32, #tpu.memory_space<smem>>
    %c0_102 = arith.constant 0 : index
    %c0_103 = arith.constant 0 : index
    %c95 = arith.constant 95 : index
    %226 = vector.load %arg5[%c0_102, %c0_103, %c95] : memref<2x2x512xf32, #tpu.memory_space<vmem>>, vector<1x2x256xf32>
    %227 = vector.shape_cast %226 : vector<1x2x256xf32> to vector<2x256xf32>
    %228 = vector.broadcast %225 : f32 to vector<2x256xf32>
    %229 = arith.mulf %228, %227 : vector<2x256xf32>
    %230 = arith.addf %224, %229 : vector<2x256xf32>
    %c16 = arith.constant 16 : index
    %231 = memref.load %arg2[%c16] : memref<98xf32, #tpu.memory_space<smem>>
    %c0_104 = arith.constant 0 : index
    %c0_105 = arith.constant 0 : index
    %c111 = arith.constant 111 : index
    %232 = vector.load %arg5[%c0_104, %c0_105, %c111] : memref<2x2x512xf32, #tpu.memory_space<vmem>>, vector<1x2x256xf32>
    %233 = vector.shape_cast %232 : vector<1x2x256xf32> to vector<2x256xf32>
    %234 = vector.broadcast %231 : f32 to vector<2x256xf32>
    %235 = arith.mulf %234, %233 : vector<2x256xf32>
    %236 = arith.addf %230, %235 : vector<2x256xf32>
    %c23 = arith.constant 23 : index
    %237 = memref.load %arg2[%c23] : memref<98xf32, #tpu.memory_space<smem>>
    %c0_106 = arith.constant 0 : index
    %c0_107 = arith.constant 0 : index
    %c127 = arith.constant 127 : index
    %238 = vector.load %arg5[%c0_106, %c0_107, %c127] : memref<2x2x512xf32, #tpu.memory_space<vmem>>, vector<1x2x256xf32>
    %239 = vector.shape_cast %238 : vector<1x2x256xf32> to vector<2x256xf32>
    %240 = vector.broadcast %237 : f32 to vector<2x256xf32>
    %241 = arith.mulf %240, %239 : vector<2x256xf32>
    %242 = arith.addf %236, %241 : vector<2x256xf32>
    %c30 = arith.constant 30 : index
    %243 = memref.load %arg2[%c30] : memref<98xf32, #tpu.memory_space<smem>>
    %c0_108 = arith.constant 0 : index
    %c0_109 = arith.constant 0 : index
    %c143 = arith.constant 143 : index
    %244 = vector.load %arg5[%c0_108, %c0_109, %c143] : memref<2x2x512xf32, #tpu.memory_space<vmem>>, vector<1x2x256xf32>
    %245 = vector.shape_cast %244 : vector<1x2x256xf32> to vector<2x256xf32>
    %246 = vector.broadcast %243 : f32 to vector<2x256xf32>
    %247 = arith.mulf %246, %245 : vector<2x256xf32>
    %248 = arith.addf %242, %247 : vector<2x256xf32>
    %c37 = arith.constant 37 : index
    %249 = memref.load %arg2[%c37] : memref<98xf32, #tpu.memory_space<smem>>
    %c0_110 = arith.constant 0 : index
    %c0_111 = arith.constant 0 : index
    %c159 = arith.constant 159 : index
    %250 = vector.load %arg5[%c0_110, %c0_111, %c159] : memref<2x2x512xf32, #tpu.memory_space<vmem>>, vector<1x2x256xf32>
    %251 = vector.shape_cast %250 : vector<1x2x256xf32> to vector<2x256xf32>
    %252 = vector.broadcast %249 : f32 to vector<2x256xf32>
    %253 = arith.mulf %252, %251 : vector<2x256xf32>
    %254 = arith.addf %248, %253 : vector<2x256xf32>
    %c44 = arith.constant 44 : index
    %255 = memref.load %arg2[%c44] : memref<98xf32, #tpu.memory_space<smem>>
    %c0_112 = arith.constant 0 : index
    %c0_113 = arith.constant 0 : index
    %c175 = arith.constant 175 : index
    %256 = vector.load %arg5[%c0_112, %c0_113, %c175] : memref<2x2x512xf32, #tpu.memory_space<vmem>>, vector<1x2x256xf32>
    %257 = vector.shape_cast %256 : vector<1x2x256xf32> to vector<2x256xf32>
    %258 = vector.broadcast %255 : f32 to vector<2x256xf32>
    %259 = arith.mulf %258, %257 : vector<2x256xf32>
    %260 = arith.addf %254, %259 : vector<2x256xf32>
    %c51 = arith.constant 51 : index
    %261 = memref.load %arg2[%c51] : memref<98xf32, #tpu.memory_space<smem>>
    %c1_114 = arith.constant 1 : index
    %c0_115 = arith.constant 0 : index
    %c79_116 = arith.constant 79 : index
    %262 = vector.load %arg5[%c1_114, %c0_115, %c79_116] : memref<2x2x512xf32, #tpu.memory_space<vmem>>, vector<1x2x256xf32>
    %263 = vector.shape_cast %262 : vector<1x2x256xf32> to vector<2x256xf32>
    %264 = vector.broadcast %261 : f32 to vector<2x256xf32>
    %265 = arith.mulf %264, %263 : vector<2x256xf32>
    %266 = arith.addf %260, %265 : vector<2x256xf32>
    %c58 = arith.constant 58 : index
    %267 = memref.load %arg2[%c58] : memref<98xf32, #tpu.memory_space<smem>>
    %c1_117 = arith.constant 1 : index
    %c0_118 = arith.constant 0 : index
    %c95_119 = arith.constant 95 : index
    %268 = vector.load %arg5[%c1_117, %c0_118, %c95_119] : memref<2x2x512xf32, #tpu.memory_space<vmem>>, vector<1x2x256xf32>
    %269 = vector.shape_cast %268 : vector<1x2x256xf32> to vector<2x256xf32>
    %270 = vector.broadcast %267 : f32 to vector<2x256xf32>
    %271 = arith.mulf %270, %269 : vector<2x256xf32>
    %272 = arith.addf %266, %271 : vector<2x256xf32>
    %c65 = arith.constant 65 : index
    %273 = memref.load %arg2[%c65] : memref<98xf32, #tpu.memory_space<smem>>
    %c1_120 = arith.constant 1 : index
    %c0_121 = arith.constant 0 : index
    %c111_122 = arith.constant 111 : index
    %274 = vector.load %arg5[%c1_120, %c0_121, %c111_122] : memref<2x2x512xf32, #tpu.memory_space<vmem>>, vector<1x2x256xf32>
    %275 = vector.shape_cast %274 : vector<1x2x256xf32> to vector<2x256xf32>
    %276 = vector.broadcast %273 : f32 to vector<2x256xf32>
    %277 = arith.mulf %276, %275 : vector<2x256xf32>
    %278 = arith.addf %272, %277 : vector<2x256xf32>
    %c72 = arith.constant 72 : index
    %279 = memref.load %arg2[%c72] : memref<98xf32, #tpu.memory_space<smem>>
    %c1_123 = arith.constant 1 : index
    %c0_124 = arith.constant 0 : index
    %c127_125 = arith.constant 127 : index
    %280 = vector.load %arg5[%c1_123, %c0_124, %c127_125] : memref<2x2x512xf32, #tpu.memory_space<vmem>>, vector<1x2x256xf32>
    %281 = vector.shape_cast %280 : vector<1x2x256xf32> to vector<2x256xf32>
    %282 = vector.broadcast %279 : f32 to vector<2x256xf32>
    %283 = arith.mulf %282, %281 : vector<2x256xf32>
    %284 = arith.addf %278, %283 : vector<2x256xf32>
    %c79_126 = arith.constant 79 : index
    %285 = memref.load %arg2[%c79_126] : memref<98xf32, #tpu.memory_space<smem>>
    %c1_127 = arith.constant 1 : index
    %c0_128 = arith.constant 0 : index
    %c143_129 = arith.constant 143 : index
    %286 = vector.load %arg5[%c1_127, %c0_128, %c143_129] : memref<2x2x512xf32, #tpu.memory_space<vmem>>, vector<1x2x256xf32>
    %287 = vector.shape_cast %286 : vector<1x2x256xf32> to vector<2x256xf32>
    %288 = vector.broadcast %285 : f32 to vector<2x256xf32>
    %289 = arith.mulf %288, %287 : vector<2x256xf32>
    %290 = arith.addf %284, %289 : vector<2x256xf32>
    %c86 = arith.constant 86 : index
    %291 = memref.load %arg2[%c86] : memref<98xf32, #tpu.memory_space<smem>>
    %c1_130 = arith.constant 1 : index
    %c0_131 = arith.constant 0 : index
    %c159_132 = arith.constant 159 : index
    %292 = vector.load %arg5[%c1_130, %c0_131, %c159_132] : memref<2x2x512xf32, #tpu.memory_space<vmem>>, vector<1x2x256xf32>
    %293 = vector.shape_cast %292 : vector<1x2x256xf32> to vector<2x256xf32>
    %294 = vector.broadcast %291 : f32 to vector<2x256xf32>
    %295 = arith.mulf %294, %293 : vector<2x256xf32>
    %296 = arith.addf %290, %295 : vector<2x256xf32>
    %c93_133 = arith.constant 93 : index
    %297 = memref.load %arg2[%c93_133] : memref<98xf32, #tpu.memory_space<smem>>
    %c1_134 = arith.constant 1 : index
    %c0_135 = arith.constant 0 : index
    %c175_136 = arith.constant 175 : index
    %298 = vector.load %arg5[%c1_134, %c0_135, %c175_136] : memref<2x2x512xf32, #tpu.memory_space<vmem>>, vector<1x2x256xf32>
    %299 = vector.shape_cast %298 : vector<1x2x256xf32> to vector<2x256xf32>
    %300 = vector.broadcast %297 : f32 to vector<2x256xf32>
    %301 = arith.mulf %300, %299 : vector<2x256xf32>
    %302 = arith.addf %296, %301 : vector<2x256xf32>
    %c-1_i32 = arith.constant -1 : i32
    %303 = vector.broadcast %c-1_i32 : i32 to vector<2x256xi32>
    %304 = arith.addi %31, %303 : vector<2x256xi32>
    %c0_i32_137 = arith.constant 0 : i32
    %305 = vector.broadcast %c0_i32_137 : i32 to vector<2x256xi32>
    %306 = arith.cmpi sge, %304, %305 : vector<2x256xi32>
    %c-1_i32_138 = arith.constant -1 : i32
    %307 = vector.broadcast %c-1_i32_138 : i32 to vector<2x256xi32>
    %308 = arith.addi %31, %307 : vector<2x256xi32>
    %c16_i32_139 = arith.constant 16 : i32
    %309 = vector.broadcast %c16_i32_139 : i32 to vector<2x256xi32>
    %310 = arith.cmpi slt, %308, %309 : vector<2x256xi32>
    %311 = arith.andi %306, %310 : vector<2x256xi1>
    %cst_140 = arith.constant 0.000000e+00 : f32
    %312 = vector.broadcast %cst_140 : f32 to vector<2x256xf32>
    %313 = arith.select %311, %302, %312 : vector<2x256xi1>, vector<2x256xf32>
    %c3 = arith.constant 3 : index
    %314 = memref.load %arg2[%c3] : memref<98xf32, #tpu.memory_space<smem>>
    %c0_141 = arith.constant 0 : index
    %c0_142 = arith.constant 0 : index
    %c80 = arith.constant 80 : index
    %315 = vector.load %arg5[%c0_141, %c0_142, %c80] : memref<2x2x512xf32, #tpu.memory_space<vmem>>, vector<1x2x256xf32>
    %316 = vector.shape_cast %315 : vector<1x2x256xf32> to vector<2x256xf32>
    %317 = vector.broadcast %314 : f32 to vector<2x256xf32>
    %318 = arith.mulf %317, %316 : vector<2x256xf32>
    %c10 = arith.constant 10 : index
    %319 = memref.load %arg2[%c10] : memref<98xf32, #tpu.memory_space<smem>>
    %c0_143 = arith.constant 0 : index
    %c0_144 = arith.constant 0 : index
    %c96 = arith.constant 96 : index
    %320 = vector.load %arg5[%c0_143, %c0_144, %c96] : memref<2x2x512xf32, #tpu.memory_space<vmem>>, vector<1x2x256xf32>
    %321 = vector.shape_cast %320 : vector<1x2x256xf32> to vector<2x256xf32>
    %322 = vector.broadcast %319 : f32 to vector<2x256xf32>
    %323 = arith.mulf %322, %321 : vector<2x256xf32>
    %324 = arith.addf %318, %323 : vector<2x256xf32>
    %c17 = arith.constant 17 : index
    %325 = memref.load %arg2[%c17] : memref<98xf32, #tpu.memory_space<smem>>
    %c0_145 = arith.constant 0 : index
    %c0_146 = arith.constant 0 : index
    %c112 = arith.constant 112 : index
    %326 = vector.load %arg5[%c0_145, %c0_146, %c112] : memref<2x2x512xf32, #tpu.memory_space<vmem>>, vector<1x2x256xf32>
    %327 = vector.shape_cast %326 : vector<1x2x256xf32> to vector<2x256xf32>
    %328 = vector.broadcast %325 : f32 to vector<2x256xf32>
    %329 = arith.mulf %328, %327 : vector<2x256xf32>
    %330 = arith.addf %324, %329 : vector<2x256xf32>
    %c24 = arith.constant 24 : index
    %331 = memref.load %arg2[%c24] : memref<98xf32, #tpu.memory_space<smem>>
    %c0_147 = arith.constant 0 : index
    %c0_148 = arith.constant 0 : index
    %c128_149 = arith.constant 128 : index
    %332 = vector.load %arg5[%c0_147, %c0_148, %c128_149] : memref<2x2x512xf32, #tpu.memory_space<vmem>>, vector<1x2x256xf32>
    %333 = vector.shape_cast %332 : vector<1x2x256xf32> to vector<2x256xf32>
    %334 = vector.broadcast %331 : f32 to vector<2x256xf32>
    %335 = arith.mulf %334, %333 : vector<2x256xf32>
    %336 = arith.addf %330, %335 : vector<2x256xf32>
    %c31 = arith.constant 31 : index
    %337 = memref.load %arg2[%c31] : memref<98xf32, #tpu.memory_space<smem>>
    %c0_150 = arith.constant 0 : index
    %c0_151 = arith.constant 0 : index
    %c144 = arith.constant 144 : index
    %338 = vector.load %arg5[%c0_150, %c0_151, %c144] : memref<2x2x512xf32, #tpu.memory_space<vmem>>, vector<1x2x256xf32>
    %339 = vector.shape_cast %338 : vector<1x2x256xf32> to vector<2x256xf32>
    %340 = vector.broadcast %337 : f32 to vector<2x256xf32>
    %341 = arith.mulf %340, %339 : vector<2x256xf32>
    %342 = arith.addf %336, %341 : vector<2x256xf32>
    %c38 = arith.constant 38 : index
    %343 = memref.load %arg2[%c38] : memref<98xf32, #tpu.memory_space<smem>>
    %c0_152 = arith.constant 0 : index
    %c0_153 = arith.constant 0 : index
    %c160 = arith.constant 160 : index
    %344 = vector.load %arg5[%c0_152, %c0_153, %c160] : memref<2x2x512xf32, #tpu.memory_space<vmem>>, vector<1x2x256xf32>
    %345 = vector.shape_cast %344 : vector<1x2x256xf32> to vector<2x256xf32>
    %346 = vector.broadcast %343 : f32 to vector<2x256xf32>
    %347 = arith.mulf %346, %345 : vector<2x256xf32>
    %348 = arith.addf %342, %347 : vector<2x256xf32>
    %c45 = arith.constant 45 : index
    %349 = memref.load %arg2[%c45] : memref<98xf32, #tpu.memory_space<smem>>
    %c0_154 = arith.constant 0 : index
    %c0_155 = arith.constant 0 : index
    %c176 = arith.constant 176 : index
    %350 = vector.load %arg5[%c0_154, %c0_155, %c176] : memref<2x2x512xf32, #tpu.memory_space<vmem>>, vector<1x2x256xf32>
    %351 = vector.shape_cast %350 : vector<1x2x256xf32> to vector<2x256xf32>
    %352 = vector.broadcast %349 : f32 to vector<2x256xf32>
    %353 = arith.mulf %352, %351 : vector<2x256xf32>
    %354 = arith.addf %348, %353 : vector<2x256xf32>
    %c52 = arith.constant 52 : index
    %355 = memref.load %arg2[%c52] : memref<98xf32, #tpu.memory_space<smem>>
    %c1_156 = arith.constant 1 : index
    %c0_157 = arith.constant 0 : index
    %c80_158 = arith.constant 80 : index
    %356 = vector.load %arg5[%c1_156, %c0_157, %c80_158] : memref<2x2x512xf32, #tpu.memory_space<vmem>>, vector<1x2x256xf32>
    %357 = vector.shape_cast %356 : vector<1x2x256xf32> to vector<2x256xf32>
    %358 = vector.broadcast %355 : f32 to vector<2x256xf32>
    %359 = arith.mulf %358, %357 : vector<2x256xf32>
    %360 = arith.addf %354, %359 : vector<2x256xf32>
    %c59 = arith.constant 59 : index
    %361 = memref.load %arg2[%c59] : memref<98xf32, #tpu.memory_space<smem>>
    %c1_159 = arith.constant 1 : index
    %c0_160 = arith.constant 0 : index
    %c96_161 = arith.constant 96 : index
    %362 = vector.load %arg5[%c1_159, %c0_160, %c96_161] : memref<2x2x512xf32, #tpu.memory_space<vmem>>, vector<1x2x256xf32>
    %363 = vector.shape_cast %362 : vector<1x2x256xf32> to vector<2x256xf32>
    %364 = vector.broadcast %361 : f32 to vector<2x256xf32>
    %365 = arith.mulf %364, %363 : vector<2x256xf32>
    %366 = arith.addf %360, %365 : vector<2x256xf32>
    %c66 = arith.constant 66 : index
    %367 = memref.load %arg2[%c66] : memref<98xf32, #tpu.memory_space<smem>>
    %c1_162 = arith.constant 1 : index
    %c0_163 = arith.constant 0 : index
    %c112_164 = arith.constant 112 : index
    %368 = vector.load %arg5[%c1_162, %c0_163, %c112_164] : memref<2x2x512xf32, #tpu.memory_space<vmem>>, vector<1x2x256xf32>
    %369 = vector.shape_cast %368 : vector<1x2x256xf32> to vector<2x256xf32>
    %370 = vector.broadcast %367 : f32 to vector<2x256xf32>
    %371 = arith.mulf %370, %369 : vector<2x256xf32>
    %372 = arith.addf %366, %371 : vector<2x256xf32>
    %c73 = arith.constant 73 : index
    %373 = memref.load %arg2[%c73] : memref<98xf32, #tpu.memory_space<smem>>
    %c1_165 = arith.constant 1 : index
    %c0_166 = arith.constant 0 : index
    %c128_167 = arith.constant 128 : index
    %374 = vector.load %arg5[%c1_165, %c0_166, %c128_167] : memref<2x2x512xf32, #tpu.memory_space<vmem>>, vector<1x2x256xf32>
    %375 = vector.shape_cast %374 : vector<1x2x256xf32> to vector<2x256xf32>
    %376 = vector.broadcast %373 : f32 to vector<2x256xf32>
    %377 = arith.mulf %376, %375 : vector<2x256xf32>
    %378 = arith.addf %372, %377 : vector<2x256xf32>
    %c80_168 = arith.constant 80 : index
    %379 = memref.load %arg2[%c80_168] : memref<98xf32, #tpu.memory_space<smem>>
    %c1_169 = arith.constant 1 : index
    %c0_170 = arith.constant 0 : index
    %c144_171 = arith.constant 144 : index
    %380 = vector.load %arg5[%c1_169, %c0_170, %c144_171] : memref<2x2x512xf32, #tpu.memory_space<vmem>>, vector<1x2x256xf32>
    %381 = vector.shape_cast %380 : vector<1x2x256xf32> to vector<2x256xf32>
    %382 = vector.broadcast %379 : f32 to vector<2x256xf32>
    %383 = arith.mulf %382, %381 : vector<2x256xf32>
    %384 = arith.addf %378, %383 : vector<2x256xf32>
    %c87 = arith.constant 87 : index
    %385 = memref.load %arg2[%c87] : memref<98xf32, #tpu.memory_space<smem>>
    %c1_172 = arith.constant 1 : index
    %c0_173 = arith.constant 0 : index
    %c160_174 = arith.constant 160 : index
    %386 = vector.load %arg5[%c1_172, %c0_173, %c160_174] : memref<2x2x512xf32, #tpu.memory_space<vmem>>, vector<1x2x256xf32>
    %387 = vector.shape_cast %386 : vector<1x2x256xf32> to vector<2x256xf32>
    %388 = vector.broadcast %385 : f32 to vector<2x256xf32>
    %389 = arith.mulf %388, %387 : vector<2x256xf32>
    %390 = arith.addf %384, %389 : vector<2x256xf32>
    %c94_175 = arith.constant 94 : index
    %391 = memref.load %arg2[%c94_175] : memref<98xf32, #tpu.memory_space<smem>>
    %c1_176 = arith.constant 1 : index
    %c0_177 = arith.constant 0 : index
    %c176_178 = arith.constant 176 : index
    %392 = vector.load %arg5[%c1_176, %c0_177, %c176_178] : memref<2x2x512xf32, #tpu.memory_space<vmem>>, vector<1x2x256xf32>
    %393 = vector.shape_cast %392 : vector<1x2x256xf32> to vector<2x256xf32>
    %394 = vector.broadcast %391 : f32 to vector<2x256xf32>
    %395 = arith.mulf %394, %393 : vector<2x256xf32>
    %396 = arith.addf %390, %395 : vector<2x256xf32>
    %c4 = arith.constant 4 : index
    %397 = memref.load %arg2[%c4] : memref<98xf32, #tpu.memory_space<smem>>
    %c0_179 = arith.constant 0 : index
    %c0_180 = arith.constant 0 : index
    %c81 = arith.constant 81 : index
    %398 = vector.load %arg5[%c0_179, %c0_180, %c81] : memref<2x2x512xf32, #tpu.memory_space<vmem>>, vector<1x2x256xf32>
    %399 = vector.shape_cast %398 : vector<1x2x256xf32> to vector<2x256xf32>
    %400 = vector.broadcast %397 : f32 to vector<2x256xf32>
    %401 = arith.mulf %400, %399 : vector<2x256xf32>
    %c11 = arith.constant 11 : index
    %402 = memref.load %arg2[%c11] : memref<98xf32, #tpu.memory_space<smem>>
    %c0_181 = arith.constant 0 : index
    %c0_182 = arith.constant 0 : index
    %c97 = arith.constant 97 : index
    %403 = vector.load %arg5[%c0_181, %c0_182, %c97] : memref<2x2x512xf32, #tpu.memory_space<vmem>>, vector<1x2x256xf32>
    %404 = vector.shape_cast %403 : vector<1x2x256xf32> to vector<2x256xf32>
    %405 = vector.broadcast %402 : f32 to vector<2x256xf32>
    %406 = arith.mulf %405, %404 : vector<2x256xf32>
    %407 = arith.addf %401, %406 : vector<2x256xf32>
    %c18 = arith.constant 18 : index
    %408 = memref.load %arg2[%c18] : memref<98xf32, #tpu.memory_space<smem>>
    %c0_183 = arith.constant 0 : index
    %c0_184 = arith.constant 0 : index
    %c113 = arith.constant 113 : index
    %409 = vector.load %arg5[%c0_183, %c0_184, %c113] : memref<2x2x512xf32, #tpu.memory_space<vmem>>, vector<1x2x256xf32>
    %410 = vector.shape_cast %409 : vector<1x2x256xf32> to vector<2x256xf32>
    %411 = vector.broadcast %408 : f32 to vector<2x256xf32>
    %412 = arith.mulf %411, %410 : vector<2x256xf32>
    %413 = arith.addf %407, %412 : vector<2x256xf32>
    %c25 = arith.constant 25 : index
    %414 = memref.load %arg2[%c25] : memref<98xf32, #tpu.memory_space<smem>>
    %c0_185 = arith.constant 0 : index
    %c0_186 = arith.constant 0 : index
    %c129 = arith.constant 129 : index
    %415 = vector.load %arg5[%c0_185, %c0_186, %c129] : memref<2x2x512xf32, #tpu.memory_space<vmem>>, vector<1x2x256xf32>
    %416 = vector.shape_cast %415 : vector<1x2x256xf32> to vector<2x256xf32>
    %417 = vector.broadcast %414 : f32 to vector<2x256xf32>
    %418 = arith.mulf %417, %416 : vector<2x256xf32>
    %419 = arith.addf %413, %418 : vector<2x256xf32>
    %c32 = arith.constant 32 : index
    %420 = memref.load %arg2[%c32] : memref<98xf32, #tpu.memory_space<smem>>
    %c0_187 = arith.constant 0 : index
    %c0_188 = arith.constant 0 : index
    %c145 = arith.constant 145 : index
    %421 = vector.load %arg5[%c0_187, %c0_188, %c145] : memref<2x2x512xf32, #tpu.memory_space<vmem>>, vector<1x2x256xf32>
    %422 = vector.shape_cast %421 : vector<1x2x256xf32> to vector<2x256xf32>
    %423 = vector.broadcast %420 : f32 to vector<2x256xf32>
    %424 = arith.mulf %423, %422 : vector<2x256xf32>
    %425 = arith.addf %419, %424 : vector<2x256xf32>
    %c39 = arith.constant 39 : index
    %426 = memref.load %arg2[%c39] : memref<98xf32, #tpu.memory_space<smem>>
    %c0_189 = arith.constant 0 : index
    %c0_190 = arith.constant 0 : index
    %c161 = arith.constant 161 : index
    %427 = vector.load %arg5[%c0_189, %c0_190, %c161] : memref<2x2x512xf32, #tpu.memory_space<vmem>>, vector<1x2x256xf32>
    %428 = vector.shape_cast %427 : vector<1x2x256xf32> to vector<2x256xf32>
    %429 = vector.broadcast %426 : f32 to vector<2x256xf32>
    %430 = arith.mulf %429, %428 : vector<2x256xf32>
    %431 = arith.addf %425, %430 : vector<2x256xf32>
    %c46 = arith.constant 46 : index
    %432 = memref.load %arg2[%c46] : memref<98xf32, #tpu.memory_space<smem>>
    %c0_191 = arith.constant 0 : index
    %c0_192 = arith.constant 0 : index
    %c177 = arith.constant 177 : index
    %433 = vector.load %arg5[%c0_191, %c0_192, %c177] : memref<2x2x512xf32, #tpu.memory_space<vmem>>, vector<1x2x256xf32>
    %434 = vector.shape_cast %433 : vector<1x2x256xf32> to vector<2x256xf32>
    %435 = vector.broadcast %432 : f32 to vector<2x256xf32>
    %436 = arith.mulf %435, %434 : vector<2x256xf32>
    %437 = arith.addf %431, %436 : vector<2x256xf32>
    %c53 = arith.constant 53 : index
    %438 = memref.load %arg2[%c53] : memref<98xf32, #tpu.memory_space<smem>>
    %c1_193 = arith.constant 1 : index
    %c0_194 = arith.constant 0 : index
    %c81_195 = arith.constant 81 : index
    %439 = vector.load %arg5[%c1_193, %c0_194, %c81_195] : memref<2x2x512xf32, #tpu.memory_space<vmem>>, vector<1x2x256xf32>
    %440 = vector.shape_cast %439 : vector<1x2x256xf32> to vector<2x256xf32>
    %441 = vector.broadcast %438 : f32 to vector<2x256xf32>
    %442 = arith.mulf %441, %440 : vector<2x256xf32>
    %443 = arith.addf %437, %442 : vector<2x256xf32>
    %c60 = arith.constant 60 : index
    %444 = memref.load %arg2[%c60] : memref<98xf32, #tpu.memory_space<smem>>
    %c1_196 = arith.constant 1 : index
    %c0_197 = arith.constant 0 : index
    %c97_198 = arith.constant 97 : index
    %445 = vector.load %arg5[%c1_196, %c0_197, %c97_198] : memref<2x2x512xf32, #tpu.memory_space<vmem>>, vector<1x2x256xf32>
    %446 = vector.shape_cast %445 : vector<1x2x256xf32> to vector<2x256xf32>
    %447 = vector.broadcast %444 : f32 to vector<2x256xf32>
    %448 = arith.mulf %447, %446 : vector<2x256xf32>
    %449 = arith.addf %443, %448 : vector<2x256xf32>
    %c67 = arith.constant 67 : index
    %450 = memref.load %arg2[%c67] : memref<98xf32, #tpu.memory_space<smem>>
    %c1_199 = arith.constant 1 : index
    %c0_200 = arith.constant 0 : index
    %c113_201 = arith.constant 113 : index
    %451 = vector.load %arg5[%c1_199, %c0_200, %c113_201] : memref<2x2x512xf32, #tpu.memory_space<vmem>>, vector<1x2x256xf32>
    %452 = vector.shape_cast %451 : vector<1x2x256xf32> to vector<2x256xf32>
    %453 = vector.broadcast %450 : f32 to vector<2x256xf32>
    %454 = arith.mulf %453, %452 : vector<2x256xf32>
    %455 = arith.addf %449, %454 : vector<2x256xf32>
    %c74 = arith.constant 74 : index
    %456 = memref.load %arg2[%c74] : memref<98xf32, #tpu.memory_space<smem>>
    %c1_202 = arith.constant 1 : index
    %c0_203 = arith.constant 0 : index
    %c129_204 = arith.constant 129 : index
    %457 = vector.load %arg5[%c1_202, %c0_203, %c129_204] : memref<2x2x512xf32, #tpu.memory_space<vmem>>, vector<1x2x256xf32>
    %458 = vector.shape_cast %457 : vector<1x2x256xf32> to vector<2x256xf32>
    %459 = vector.broadcast %456 : f32 to vector<2x256xf32>
    %460 = arith.mulf %459, %458 : vector<2x256xf32>
    %461 = arith.addf %455, %460 : vector<2x256xf32>
    %c81_205 = arith.constant 81 : index
    %462 = memref.load %arg2[%c81_205] : memref<98xf32, #tpu.memory_space<smem>>
    %c1_206 = arith.constant 1 : index
    %c0_207 = arith.constant 0 : index
    %c145_208 = arith.constant 145 : index
    %463 = vector.load %arg5[%c1_206, %c0_207, %c145_208] : memref<2x2x512xf32, #tpu.memory_space<vmem>>, vector<1x2x256xf32>
    %464 = vector.shape_cast %463 : vector<1x2x256xf32> to vector<2x256xf32>
    %465 = vector.broadcast %462 : f32 to vector<2x256xf32>
    %466 = arith.mulf %465, %464 : vector<2x256xf32>
    %467 = arith.addf %461, %466 : vector<2x256xf32>
    %c88 = arith.constant 88 : index
    %468 = memref.load %arg2[%c88] : memref<98xf32, #tpu.memory_space<smem>>
    %c1_209 = arith.constant 1 : index
    %c0_210 = arith.constant 0 : index
    %c161_211 = arith.constant 161 : index
    %469 = vector.load %arg5[%c1_209, %c0_210, %c161_211] : memref<2x2x512xf32, #tpu.memory_space<vmem>>, vector<1x2x256xf32>
    %470 = vector.shape_cast %469 : vector<1x2x256xf32> to vector<2x256xf32>
    %471 = vector.broadcast %468 : f32 to vector<2x256xf32>
    %472 = arith.mulf %471, %470 : vector<2x256xf32>
    %473 = arith.addf %467, %472 : vector<2x256xf32>
    %c95_212 = arith.constant 95 : index
    %474 = memref.load %arg2[%c95_212] : memref<98xf32, #tpu.memory_space<smem>>
    %c1_213 = arith.constant 1 : index
    %c0_214 = arith.constant 0 : index
    %c177_215 = arith.constant 177 : index
    %475 = vector.load %arg5[%c1_213, %c0_214, %c177_215] : memref<2x2x512xf32, #tpu.memory_space<vmem>>, vector<1x2x256xf32>
    %476 = vector.shape_cast %475 : vector<1x2x256xf32> to vector<2x256xf32>
    %477 = vector.broadcast %474 : f32 to vector<2x256xf32>
    %478 = arith.mulf %477, %476 : vector<2x256xf32>
    %479 = arith.addf %473, %478 : vector<2x256xf32>
    %c1_i32_216 = arith.constant 1 : i32
    %480 = vector.broadcast %c1_i32_216 : i32 to vector<2x256xi32>
    %481 = arith.addi %31, %480 : vector<2x256xi32>
    %c0_i32_217 = arith.constant 0 : i32
    %482 = vector.broadcast %c0_i32_217 : i32 to vector<2x256xi32>
    %483 = arith.cmpi sge, %481, %482 : vector<2x256xi32>
    %c1_i32_218 = arith.constant 1 : i32
    %484 = vector.broadcast %c1_i32_218 : i32 to vector<2x256xi32>
    %485 = arith.addi %31, %484 : vector<2x256xi32>
    %c16_i32_219 = arith.constant 16 : i32
    %486 = vector.broadcast %c16_i32_219 : i32 to vector<2x256xi32>
    %487 = arith.cmpi slt, %485, %486 : vector<2x256xi32>
    %488 = arith.andi %483, %487 : vector<2x256xi1>
    %cst_220 = arith.constant 0.000000e+00 : f32
    %489 = vector.broadcast %cst_220 : f32 to vector<2x256xf32>
    %490 = arith.select %488, %479, %489 : vector<2x256xi1>, vector<2x256xf32>
    %c5 = arith.constant 5 : index
    %491 = memref.load %arg2[%c5] : memref<98xf32, #tpu.memory_space<smem>>
    %c0_221 = arith.constant 0 : index
    %c0_222 = arith.constant 0 : index
    %c82 = arith.constant 82 : index
    %492 = vector.load %arg5[%c0_221, %c0_222, %c82] : memref<2x2x512xf32, #tpu.memory_space<vmem>>, vector<1x2x256xf32>
    %493 = vector.shape_cast %492 : vector<1x2x256xf32> to vector<2x256xf32>
    %494 = vector.broadcast %491 : f32 to vector<2x256xf32>
    %495 = arith.mulf %494, %493 : vector<2x256xf32>
    %c12 = arith.constant 12 : index
    %496 = memref.load %arg2[%c12] : memref<98xf32, #tpu.memory_space<smem>>
    %c0_223 = arith.constant 0 : index
    %c0_224 = arith.constant 0 : index
    %c98 = arith.constant 98 : index
    %497 = vector.load %arg5[%c0_223, %c0_224, %c98] : memref<2x2x512xf32, #tpu.memory_space<vmem>>, vector<1x2x256xf32>
    %498 = vector.shape_cast %497 : vector<1x2x256xf32> to vector<2x256xf32>
    %499 = vector.broadcast %496 : f32 to vector<2x256xf32>
    %500 = arith.mulf %499, %498 : vector<2x256xf32>
    %501 = arith.addf %495, %500 : vector<2x256xf32>
    %c19 = arith.constant 19 : index
    %502 = memref.load %arg2[%c19] : memref<98xf32, #tpu.memory_space<smem>>
    %c0_225 = arith.constant 0 : index
    %c0_226 = arith.constant 0 : index
    %c114 = arith.constant 114 : index
    %503 = vector.load %arg5[%c0_225, %c0_226, %c114] : memref<2x2x512xf32, #tpu.memory_space<vmem>>, vector<1x2x256xf32>
    %504 = vector.shape_cast %503 : vector<1x2x256xf32> to vector<2x256xf32>
    %505 = vector.broadcast %502 : f32 to vector<2x256xf32>
    %506 = arith.mulf %505, %504 : vector<2x256xf32>
    %507 = arith.addf %501, %506 : vector<2x256xf32>
    %c26 = arith.constant 26 : index
    %508 = memref.load %arg2[%c26] : memref<98xf32, #tpu.memory_space<smem>>
    %c0_227 = arith.constant 0 : index
    %c0_228 = arith.constant 0 : index
    %c130 = arith.constant 130 : index
    %509 = vector.load %arg5[%c0_227, %c0_228, %c130] : memref<2x2x512xf32, #tpu.memory_space<vmem>>, vector<1x2x256xf32>
    %510 = vector.shape_cast %509 : vector<1x2x256xf32> to vector<2x256xf32>
    %511 = vector.broadcast %508 : f32 to vector<2x256xf32>
    %512 = arith.mulf %511, %510 : vector<2x256xf32>
    %513 = arith.addf %507, %512 : vector<2x256xf32>
    %c33 = arith.constant 33 : index
    %514 = memref.load %arg2[%c33] : memref<98xf32, #tpu.memory_space<smem>>
    %c0_229 = arith.constant 0 : index
    %c0_230 = arith.constant 0 : index
    %c146 = arith.constant 146 : index
    %515 = vector.load %arg5[%c0_229, %c0_230, %c146] : memref<2x2x512xf32, #tpu.memory_space<vmem>>, vector<1x2x256xf32>
    %516 = vector.shape_cast %515 : vector<1x2x256xf32> to vector<2x256xf32>
    %517 = vector.broadcast %514 : f32 to vector<2x256xf32>
    %518 = arith.mulf %517, %516 : vector<2x256xf32>
    %519 = arith.addf %513, %518 : vector<2x256xf32>
    %c40 = arith.constant 40 : index
    %520 = memref.load %arg2[%c40] : memref<98xf32, #tpu.memory_space<smem>>
    %c0_231 = arith.constant 0 : index
    %c0_232 = arith.constant 0 : index
    %c162 = arith.constant 162 : index
    %521 = vector.load %arg5[%c0_231, %c0_232, %c162] : memref<2x2x512xf32, #tpu.memory_space<vmem>>, vector<1x2x256xf32>
    %522 = vector.shape_cast %521 : vector<1x2x256xf32> to vector<2x256xf32>
    %523 = vector.broadcast %520 : f32 to vector<2x256xf32>
    %524 = arith.mulf %523, %522 : vector<2x256xf32>
    %525 = arith.addf %519, %524 : vector<2x256xf32>
    %c47 = arith.constant 47 : index
    %526 = memref.load %arg2[%c47] : memref<98xf32, #tpu.memory_space<smem>>
    %c0_233 = arith.constant 0 : index
    %c0_234 = arith.constant 0 : index
    %c178 = arith.constant 178 : index
    %527 = vector.load %arg5[%c0_233, %c0_234, %c178] : memref<2x2x512xf32, #tpu.memory_space<vmem>>, vector<1x2x256xf32>
    %528 = vector.shape_cast %527 : vector<1x2x256xf32> to vector<2x256xf32>
    %529 = vector.broadcast %526 : f32 to vector<2x256xf32>
    %530 = arith.mulf %529, %528 : vector<2x256xf32>
    %531 = arith.addf %525, %530 : vector<2x256xf32>
    %c54 = arith.constant 54 : index
    %532 = memref.load %arg2[%c54] : memref<98xf32, #tpu.memory_space<smem>>
    %c1_235 = arith.constant 1 : index
    %c0_236 = arith.constant 0 : index
    %c82_237 = arith.constant 82 : index
    %533 = vector.load %arg5[%c1_235, %c0_236, %c82_237] : memref<2x2x512xf32, #tpu.memory_space<vmem>>, vector<1x2x256xf32>
    %534 = vector.shape_cast %533 : vector<1x2x256xf32> to vector<2x256xf32>
    %535 = vector.broadcast %532 : f32 to vector<2x256xf32>
    %536 = arith.mulf %535, %534 : vector<2x256xf32>
    %537 = arith.addf %531, %536 : vector<2x256xf32>
    %c61 = arith.constant 61 : index
    %538 = memref.load %arg2[%c61] : memref<98xf32, #tpu.memory_space<smem>>
    %c1_238 = arith.constant 1 : index
    %c0_239 = arith.constant 0 : index
    %c98_240 = arith.constant 98 : index
    %539 = vector.load %arg5[%c1_238, %c0_239, %c98_240] : memref<2x2x512xf32, #tpu.memory_space<vmem>>, vector<1x2x256xf32>
    %540 = vector.shape_cast %539 : vector<1x2x256xf32> to vector<2x256xf32>
    %541 = vector.broadcast %538 : f32 to vector<2x256xf32>
    %542 = arith.mulf %541, %540 : vector<2x256xf32>
    %543 = arith.addf %537, %542 : vector<2x256xf32>
    %c68 = arith.constant 68 : index
    %544 = memref.load %arg2[%c68] : memref<98xf32, #tpu.memory_space<smem>>
    %c1_241 = arith.constant 1 : index
    %c0_242 = arith.constant 0 : index
    %c114_243 = arith.constant 114 : index
    %545 = vector.load %arg5[%c1_241, %c0_242, %c114_243] : memref<2x2x512xf32, #tpu.memory_space<vmem>>, vector<1x2x256xf32>
    %546 = vector.shape_cast %545 : vector<1x2x256xf32> to vector<2x256xf32>
    %547 = vector.broadcast %544 : f32 to vector<2x256xf32>
    %548 = arith.mulf %547, %546 : vector<2x256xf32>
    %549 = arith.addf %543, %548 : vector<2x256xf32>
    %c75 = arith.constant 75 : index
    %550 = memref.load %arg2[%c75] : memref<98xf32, #tpu.memory_space<smem>>
    %c1_244 = arith.constant 1 : index
    %c0_245 = arith.constant 0 : index
    %c130_246 = arith.constant 130 : index
    %551 = vector.load %arg5[%c1_244, %c0_245, %c130_246] : memref<2x2x512xf32, #tpu.memory_space<vmem>>, vector<1x2x256xf32>
    %552 = vector.shape_cast %551 : vector<1x2x256xf32> to vector<2x256xf32>
    %553 = vector.broadcast %550 : f32 to vector<2x256xf32>
    %554 = arith.mulf %553, %552 : vector<2x256xf32>
    %555 = arith.addf %549, %554 : vector<2x256xf32>
    %c82_247 = arith.constant 82 : index
    %556 = memref.load %arg2[%c82_247] : memref<98xf32, #tpu.memory_space<smem>>
    %c1_248 = arith.constant 1 : index
    %c0_249 = arith.constant 0 : index
    %c146_250 = arith.constant 146 : index
    %557 = vector.load %arg5[%c1_248, %c0_249, %c146_250] : memref<2x2x512xf32, #tpu.memory_space<vmem>>, vector<1x2x256xf32>
    %558 = vector.shape_cast %557 : vector<1x2x256xf32> to vector<2x256xf32>
    %559 = vector.broadcast %556 : f32 to vector<2x256xf32>
    %560 = arith.mulf %559, %558 : vector<2x256xf32>
    %561 = arith.addf %555, %560 : vector<2x256xf32>
    %c89 = arith.constant 89 : index
    %562 = memref.load %arg2[%c89] : memref<98xf32, #tpu.memory_space<smem>>
    %c1_251 = arith.constant 1 : index
    %c0_252 = arith.constant 0 : index
    %c162_253 = arith.constant 162 : index
    %563 = vector.load %arg5[%c1_251, %c0_252, %c162_253] : memref<2x2x512xf32, #tpu.memory_space<vmem>>, vector<1x2x256xf32>
    %564 = vector.shape_cast %563 : vector<1x2x256xf32> to vector<2x256xf32>
    %565 = vector.broadcast %562 : f32 to vector<2x256xf32>
    %566 = arith.mulf %565, %564 : vector<2x256xf32>
    %567 = arith.addf %561, %566 : vector<2x256xf32>
    %c96_254 = arith.constant 96 : index
    %568 = memref.load %arg2[%c96_254] : memref<98xf32, #tpu.memory_space<smem>>
    %c1_255 = arith.constant 1 : index
    %c0_256 = arith.constant 0 : index
    %c178_257 = arith.constant 178 : index
    %569 = vector.load %arg5[%c1_255, %c0_256, %c178_257] : memref<2x2x512xf32, #tpu.memory_space<vmem>>, vector<1x2x256xf32>
    %570 = vector.shape_cast %569 : vector<1x2x256xf32> to vector<2x256xf32>
    %571 = vector.broadcast %568 : f32 to vector<2x256xf32>
    %572 = arith.mulf %571, %570 : vector<2x256xf32>
    %573 = arith.addf %567, %572 : vector<2x256xf32>
    %c2_i32 = arith.constant 2 : i32
    %574 = vector.broadcast %c2_i32 : i32 to vector<2x256xi32>
    %575 = arith.addi %31, %574 : vector<2x256xi32>
    %c0_i32_258 = arith.constant 0 : i32
    %576 = vector.broadcast %c0_i32_258 : i32 to vector<2x256xi32>
    %577 = arith.cmpi sge, %575, %576 : vector<2x256xi32>
    %c2_i32_259 = arith.constant 2 : i32
    %578 = vector.broadcast %c2_i32_259 : i32 to vector<2x256xi32>
    %579 = arith.addi %31, %578 : vector<2x256xi32>
    %c16_i32_260 = arith.constant 16 : i32
    %580 = vector.broadcast %c16_i32_260 : i32 to vector<2x256xi32>
    %581 = arith.cmpi slt, %579, %580 : vector<2x256xi32>
    %582 = arith.andi %577, %581 : vector<2x256xi1>
    %cst_261 = arith.constant 0.000000e+00 : f32
    %583 = vector.broadcast %cst_261 : f32 to vector<2x256xf32>
    %584 = arith.select %582, %573, %583 : vector<2x256xi1>, vector<2x256xf32>
    %c6 = arith.constant 6 : index
    %585 = memref.load %arg2[%c6] : memref<98xf32, #tpu.memory_space<smem>>
    %c0_262 = arith.constant 0 : index
    %c0_263 = arith.constant 0 : index
    %c83 = arith.constant 83 : index
    %586 = vector.load %arg5[%c0_262, %c0_263, %c83] : memref<2x2x512xf32, #tpu.memory_space<vmem>>, vector<1x2x256xf32>
    %587 = vector.shape_cast %586 : vector<1x2x256xf32> to vector<2x256xf32>
    %588 = vector.broadcast %585 : f32 to vector<2x256xf32>
    %589 = arith.mulf %588, %587 : vector<2x256xf32>
    %c13 = arith.constant 13 : index
    %590 = memref.load %arg2[%c13] : memref<98xf32, #tpu.memory_space<smem>>
    %c0_264 = arith.constant 0 : index
    %c0_265 = arith.constant 0 : index
    %c99 = arith.constant 99 : index
    %591 = vector.load %arg5[%c0_264, %c0_265, %c99] : memref<2x2x512xf32, #tpu.memory_space<vmem>>, vector<1x2x256xf32>
    %592 = vector.shape_cast %591 : vector<1x2x256xf32> to vector<2x256xf32>
    %593 = vector.broadcast %590 : f32 to vector<2x256xf32>
    %594 = arith.mulf %593, %592 : vector<2x256xf32>
    %595 = arith.addf %589, %594 : vector<2x256xf32>
    %c20 = arith.constant 20 : index
    %596 = memref.load %arg2[%c20] : memref<98xf32, #tpu.memory_space<smem>>
    %c0_266 = arith.constant 0 : index
    %c0_267 = arith.constant 0 : index
    %c115 = arith.constant 115 : index
    %597 = vector.load %arg5[%c0_266, %c0_267, %c115] : memref<2x2x512xf32, #tpu.memory_space<vmem>>, vector<1x2x256xf32>
    %598 = vector.shape_cast %597 : vector<1x2x256xf32> to vector<2x256xf32>
    %599 = vector.broadcast %596 : f32 to vector<2x256xf32>
    %600 = arith.mulf %599, %598 : vector<2x256xf32>
    %601 = arith.addf %595, %600 : vector<2x256xf32>
    %c27 = arith.constant 27 : index
    %602 = memref.load %arg2[%c27] : memref<98xf32, #tpu.memory_space<smem>>
    %c0_268 = arith.constant 0 : index
    %c0_269 = arith.constant 0 : index
    %c131 = arith.constant 131 : index
    %603 = vector.load %arg5[%c0_268, %c0_269, %c131] : memref<2x2x512xf32, #tpu.memory_space<vmem>>, vector<1x2x256xf32>
    %604 = vector.shape_cast %603 : vector<1x2x256xf32> to vector<2x256xf32>
    %605 = vector.broadcast %602 : f32 to vector<2x256xf32>
    %606 = arith.mulf %605, %604 : vector<2x256xf32>
    %607 = arith.addf %601, %606 : vector<2x256xf32>
    %c34 = arith.constant 34 : index
    %608 = memref.load %arg2[%c34] : memref<98xf32, #tpu.memory_space<smem>>
    %c0_270 = arith.constant 0 : index
    %c0_271 = arith.constant 0 : index
    %c147 = arith.constant 147 : index
    %609 = vector.load %arg5[%c0_270, %c0_271, %c147] : memref<2x2x512xf32, #tpu.memory_space<vmem>>, vector<1x2x256xf32>
    %610 = vector.shape_cast %609 : vector<1x2x256xf32> to vector<2x256xf32>
    %611 = vector.broadcast %608 : f32 to vector<2x256xf32>
    %612 = arith.mulf %611, %610 : vector<2x256xf32>
    %613 = arith.addf %607, %612 : vector<2x256xf32>
    %c41 = arith.constant 41 : index
    %614 = memref.load %arg2[%c41] : memref<98xf32, #tpu.memory_space<smem>>
    %c0_272 = arith.constant 0 : index
    %c0_273 = arith.constant 0 : index
    %c163 = arith.constant 163 : index
    %615 = vector.load %arg5[%c0_272, %c0_273, %c163] : memref<2x2x512xf32, #tpu.memory_space<vmem>>, vector<1x2x256xf32>
    %616 = vector.shape_cast %615 : vector<1x2x256xf32> to vector<2x256xf32>
    %617 = vector.broadcast %614 : f32 to vector<2x256xf32>
    %618 = arith.mulf %617, %616 : vector<2x256xf32>
    %619 = arith.addf %613, %618 : vector<2x256xf32>
    %c48 = arith.constant 48 : index
    %620 = memref.load %arg2[%c48] : memref<98xf32, #tpu.memory_space<smem>>
    %c0_274 = arith.constant 0 : index
    %c0_275 = arith.constant 0 : index
    %c179 = arith.constant 179 : index
    %621 = vector.load %arg5[%c0_274, %c0_275, %c179] : memref<2x2x512xf32, #tpu.memory_space<vmem>>, vector<1x2x256xf32>
    %622 = vector.shape_cast %621 : vector<1x2x256xf32> to vector<2x256xf32>
    %623 = vector.broadcast %620 : f32 to vector<2x256xf32>
    %624 = arith.mulf %623, %622 : vector<2x256xf32>
    %625 = arith.addf %619, %624 : vector<2x256xf32>
    %c55 = arith.constant 55 : index
    %626 = memref.load %arg2[%c55] : memref<98xf32, #tpu.memory_space<smem>>
    %c1_276 = arith.constant 1 : index
    %c0_277 = arith.constant 0 : index
    %c83_278 = arith.constant 83 : index
    %627 = vector.load %arg5[%c1_276, %c0_277, %c83_278] : memref<2x2x512xf32, #tpu.memory_space<vmem>>, vector<1x2x256xf32>
    %628 = vector.shape_cast %627 : vector<1x2x256xf32> to vector<2x256xf32>
    %629 = vector.broadcast %626 : f32 to vector<2x256xf32>
    %630 = arith.mulf %629, %628 : vector<2x256xf32>
    %631 = arith.addf %625, %630 : vector<2x256xf32>
    %c62 = arith.constant 62 : index
    %632 = memref.load %arg2[%c62] : memref<98xf32, #tpu.memory_space<smem>>
    %c1_279 = arith.constant 1 : index
    %c0_280 = arith.constant 0 : index
    %c99_281 = arith.constant 99 : index
    %633 = vector.load %arg5[%c1_279, %c0_280, %c99_281] : memref<2x2x512xf32, #tpu.memory_space<vmem>>, vector<1x2x256xf32>
    %634 = vector.shape_cast %633 : vector<1x2x256xf32> to vector<2x256xf32>
    %635 = vector.broadcast %632 : f32 to vector<2x256xf32>
    %636 = arith.mulf %635, %634 : vector<2x256xf32>
    %637 = arith.addf %631, %636 : vector<2x256xf32>
    %c69 = arith.constant 69 : index
    %638 = memref.load %arg2[%c69] : memref<98xf32, #tpu.memory_space<smem>>
    %c1_282 = arith.constant 1 : index
    %c0_283 = arith.constant 0 : index
    %c115_284 = arith.constant 115 : index
    %639 = vector.load %arg5[%c1_282, %c0_283, %c115_284] : memref<2x2x512xf32, #tpu.memory_space<vmem>>, vector<1x2x256xf32>
    %640 = vector.shape_cast %639 : vector<1x2x256xf32> to vector<2x256xf32>
    %641 = vector.broadcast %638 : f32 to vector<2x256xf32>
    %642 = arith.mulf %641, %640 : vector<2x256xf32>
    %643 = arith.addf %637, %642 : vector<2x256xf32>
    %c76 = arith.constant 76 : index
    %644 = memref.load %arg2[%c76] : memref<98xf32, #tpu.memory_space<smem>>
    %c1_285 = arith.constant 1 : index
    %c0_286 = arith.constant 0 : index
    %c131_287 = arith.constant 131 : index
    %645 = vector.load %arg5[%c1_285, %c0_286, %c131_287] : memref<2x2x512xf32, #tpu.memory_space<vmem>>, vector<1x2x256xf32>
    %646 = vector.shape_cast %645 : vector<1x2x256xf32> to vector<2x256xf32>
    %647 = vector.broadcast %644 : f32 to vector<2x256xf32>
    %648 = arith.mulf %647, %646 : vector<2x256xf32>
    %649 = arith.addf %643, %648 : vector<2x256xf32>
    %c83_288 = arith.constant 83 : index
    %650 = memref.load %arg2[%c83_288] : memref<98xf32, #tpu.memory_space<smem>>
    %c1_289 = arith.constant 1 : index
    %c0_290 = arith.constant 0 : index
    %c147_291 = arith.constant 147 : index
    %651 = vector.load %arg5[%c1_289, %c0_290, %c147_291] : memref<2x2x512xf32, #tpu.memory_space<vmem>>, vector<1x2x256xf32>
    %652 = vector.shape_cast %651 : vector<1x2x256xf32> to vector<2x256xf32>
    %653 = vector.broadcast %650 : f32 to vector<2x256xf32>
    %654 = arith.mulf %653, %652 : vector<2x256xf32>
    %655 = arith.addf %649, %654 : vector<2x256xf32>
    %c90 = arith.constant 90 : index
    %656 = memref.load %arg2[%c90] : memref<98xf32, #tpu.memory_space<smem>>
    %c1_292 = arith.constant 1 : index
    %c0_293 = arith.constant 0 : index
    %c163_294 = arith.constant 163 : index
    %657 = vector.load %arg5[%c1_292, %c0_293, %c163_294] : memref<2x2x512xf32, #tpu.memory_space<vmem>>, vector<1x2x256xf32>
    %658 = vector.shape_cast %657 : vector<1x2x256xf32> to vector<2x256xf32>
    %659 = vector.broadcast %656 : f32 to vector<2x256xf32>
    %660 = arith.mulf %659, %658 : vector<2x256xf32>
    %661 = arith.addf %655, %660 : vector<2x256xf32>
    %c97_295 = arith.constant 97 : index
    %662 = memref.load %arg2[%c97_295] : memref<98xf32, #tpu.memory_space<smem>>
    %c1_296 = arith.constant 1 : index
    %c0_297 = arith.constant 0 : index
    %c179_298 = arith.constant 179 : index
    %663 = vector.load %arg5[%c1_296, %c0_297, %c179_298] : memref<2x2x512xf32, #tpu.memory_space<vmem>>, vector<1x2x256xf32>
    %664 = vector.shape_cast %663 : vector<1x2x256xf32> to vector<2x256xf32>
    %665 = vector.broadcast %662 : f32 to vector<2x256xf32>
    %666 = arith.mulf %665, %664 : vector<2x256xf32>
    %667 = arith.addf %661, %666 : vector<2x256xf32>
    %c3_i32 = arith.constant 3 : i32
    %668 = vector.broadcast %c3_i32 : i32 to vector<2x256xi32>
    %669 = arith.addi %31, %668 : vector<2x256xi32>
    %c0_i32_299 = arith.constant 0 : i32
    %670 = vector.broadcast %c0_i32_299 : i32 to vector<2x256xi32>
    %671 = arith.cmpi sge, %669, %670 : vector<2x256xi32>
    %c3_i32_300 = arith.constant 3 : i32
    %672 = vector.broadcast %c3_i32_300 : i32 to vector<2x256xi32>
    %673 = arith.addi %31, %672 : vector<2x256xi32>
    %c16_i32_301 = arith.constant 16 : i32
    %674 = vector.broadcast %c16_i32_301 : i32 to vector<2x256xi32>
    %675 = arith.cmpi slt, %673, %674 : vector<2x256xi32>
    %676 = arith.andi %671, %675 : vector<2x256xi1>
    %cst_302 = arith.constant 0.000000e+00 : f32
    %677 = vector.broadcast %cst_302 : f32 to vector<2x256xf32>
    %678 = arith.select %676, %667, %677 : vector<2x256xi1>, vector<2x256xf32>
    %679 = arith.addf %125, %219 : vector<2x256xf32>
    %680 = arith.addf %679, %313 : vector<2x256xf32>
    %681 = arith.addf %680, %396 : vector<2x256xf32>
    %682 = arith.addf %681, %490 : vector<2x256xf32>
    %683 = arith.addf %682, %584 : vector<2x256xf32>
    %684 = arith.addf %683, %678 : vector<2x256xf32>
    %c0_303 = arith.constant 0 : index
    %685 = memref.load %arg3[%c0_303] : memref<1xf32, #tpu.memory_space<smem>>
    %686 = vector.broadcast %685 : f32 to vector<2x256xf32>
    %687 = arith.addf %684, %686 : vector<2x256xf32>
    %688 = arith.negf %687 : vector<2x256xf32>
    %689 = math.exp %688 : vector<2x256xf32>
    %cst_304 = arith.constant 1.000000e+00 : f32
    %690 = vector.broadcast %cst_304 : f32 to vector<2x256xf32>
    %691 = arith.addf %690, %689 : vector<2x256xf32>
    %692 = arith.divf %690, %691 : vector<2x256xf32>
    %693 = vector.shape_cast %692 : vector<2x256xf32> to vector<2x1x256xf32>
    %694 = vector.broadcast %693 : vector<2x1x256xf32> to vector<2x4x256xf32>
    %695 = arith.mulf %0, %694 : vector<2x4x256xf32>
    %c0_305 = arith.constant 0 : index
    %c0_306 = arith.constant 0 : index
    %c0_307 = arith.constant 0 : index
    %696 = vector.load %arg4[%c0_305, %c0_306, %c0_307] : memref<2x4x256xf32, #tpu.memory_space<vmem>>, vector<2x4x256xf32>
    tpu.vector_store %arg4[%c0_305, %c0_306, %c0_307], %695 {strides = array<i32>} : memref<2x4x256xf32, #tpu.memory_space<vmem>>, vector<2x4x256xf32>,
    return
  }
  func.func @transform_0(%arg0: i32) -> (i32, i32, i32) {
    %c0_i32 = arith.constant 0 : i32
    %c0_i32_0 = arith.constant 0 : i32
    %c0_i32_1 = arith.constant 0 : i32
    return %arg0, %c0_i32, %c0_i32_0 : i32, i32, i32
  }
  func.func @transform_1(%arg0: i32) -> i32 {
    %c0_i32 = arith.constant 0 : i32
    %c0_i32_0 = arith.constant 0 : i32
    return %c0_i32 : i32
  }
  func.func @transform_2(%arg0: i32) -> i32 {
    %c0_i32 = arith.constant 0 : i32
    %c0_i32_0 = arith.constant 0 : i32
    return %c0_i32 : i32
  }
  func.func @transform_3(%arg0: i32) -> (i32, i32, i32) {
    %c0_i32 = arith.constant 0 : i32
    %c0_i32_0 = arith.constant 0 : i32
    %c0_i32_1 = arith.constant 0 : i32
    return %arg0, %c0_i32, %c0_i32_0 : i32, i32, i32
  }
}

</mosaic_0001>

<llo_original>
// kernel: tpu_custom_call.1
$region0: #{tpu_custom_call.1}
  #allocation0 [shape = 'u32[]', space=smem, size = 0x4, offset = 0x4, fixed_abs, tag = 'smem constant byte address 0x4 - core index']
  #allocation1 [shape = 'u32[144,128]{1,0:T(1,128)}', space=vmem, size = 0x12000, scoped, tag = 'internal scratch']
  #allocation2 [shape = 'f32[2,2,512]{2,1,0:T(2,128)}', space=vmem, size = 0x2000, scoped, tag = 'scratch operand']
  #allocation3 [shape = 'f32[1]{0:T(128)S(6)}', space=smem, size = 0x200, scoped, tag = 'scoped memory for tpu_custom_call.1']
  %s0 = inlined_call_operand.hbm [shape: f32[2,4,256], index: 0, kind: input, shape index: {}]
  %s1 = inlined_call_operand.vmem [shape: f32[98], index: 1, kind: input, shape index: {}]
  %s2 = inlined_call_operand.<no memory space> [shape: f32[1], index: 2, kind: input, shape index: {}]
  %s3 = inlined_call_operand.hbm [shape: f32[2,4,256], index: 3, kind: output, shape index: {}]
  %s4 = sld [smem:[#allocation0]]
  $region30: #{tpu_custom_call.1} parent=0
    _
  %s6 = ssub.s32 1, %s4
  %s7 = scalar_select 0, %s6, %s4
  %8 = sst [smem:[#allocation3]] %s2
  $region1: #{tpu_custom_call.1} parent=0
    #allocation4 [shape = 'u8[8192]{0}', space=vmem, size = 0x2000, scoped, tag = 'input window, operand 0, single buffered']
    #allocation5 [shape = 's32[1]{0}', space=sflag, size = 0x4, scoped, tag = 'scoped memory for tpu_custom_call.1']
    #allocation6 [shape = 's32[1]{0}', space=sflag, size = 0x4, scoped, tag = 'scoped memory for tpu_custom_call.1']
    #allocation7 [shape = 's32[1]{0}', space=sflag, size = 0x4, scoped, tag = 'scoped memory for tpu_custom_call.1']
    #allocation8 [shape = 'u8[512]{0}', space=smem, size = 0x200, scoped, tag = 'input window, operand 1, single buffered']
    #allocation9 [shape = 'u8[8192]{0}', space=vmem, size = 0x2000, scoped, tag = 'output window, operand 0, single buffered']
    %9 = vsyncpa [#allocation5], 0
    %10 = vsyncpa [#allocation7], 0
    %11 = vsyncpa [#allocation6], 0
    // Predicated region
    $region2: #{tpu_custom_call.1} parent=1 // pred_check
      _
    $region3: #{tpu_custom_call.1} parent=1 // pred_check_branch
      %13 = sbr.rel (0) target = $region5
    $region4: #{tpu_custom_call.1} parent=1 // pred_region
      %s15 = ssub.s32 256, 256
      %16 = vsyncadd [#allocation5], %s15
      %s17 = sshll.u32 [#allocation4], 4
      %s18 = int_to_ptr.vmem [resolvable:$true] %s17
      %23 = dma.hbm_to_vmem [thread:$0]  %s0, 256, %s18, [#allocation5], 128, 128, 8
    $region5: #{tpu_custom_call.1} parent=1 // pred_fallthru
      _
    // Predicated region
    $region6: #{tpu_custom_call.1} parent=1 // pred_check
      _
    $region7: #{tpu_custom_call.1} parent=1 // pred_check_branch
      %25 = sbr.rel (0) target = $region9
    $region8: #{tpu_custom_call.1} parent=1 // pred_region
      %s27 = ssub.s32 16, 16
      %28 = vsyncadd [#allocation7], %s27
      %s30 = sshll.u32 %s1, 4
      %s31 = int_to_ptr.vmem [resolvable:$true] %s30
      %33 = dma.vmem_to_smem %s31, 16, [#allocation8], [#allocation7]
    $region9: #{tpu_custom_call.1} parent=1 // pred_fallthru
      _
    // Predicated region
    $region10: #{tpu_custom_call.1} parent=1 // pred_check
      _
    $region11: #{tpu_custom_call.1} parent=1 // pred_check_branch
      %35 = sbr.rel (0) target = $region13
    $region12: #{tpu_custom_call.1} parent=1 // pred_region
      _
    $region13: #{tpu_custom_call.1} parent=1 // pred_fallthru
      _
    // Predicated region
    $region14: #{tpu_custom_call.1} parent=1 // pred_check
      _
    $region15: #{tpu_custom_call.1} parent=1 // pred_check_branch
      %37 = sbr.rel (0) target = $region17
    $region16: #{tpu_custom_call.1} parent=1 // pred_region
      %38 = dma.done [#allocation5], 256
    $region17: #{tpu_custom_call.1} parent=1 // pred_fallthru
      _
    // Predicated region
    $region18: #{tpu_custom_call.1} parent=1 // pred_check
      _
    $region19: #{tpu_custom_call.1} parent=1 // pred_check_branch
      %40 = sbr.rel (0) target = $region21
    $region20: #{tpu_custom_call.1} parent=1 // pred_region
      %41 = dma.done [#allocation7], 16
    $region21: #{tpu_custom_call.1} parent=1 // pred_fallthru
      _
    %42 = sfence
    %v43 = vld [vmem:[#allocation4] sm:$0xff]
    %v44 = vld [vmem:[#allocation4 + $0x8] sm:$0xff]
    %v47 = vcombine.high %v43, %v43
    %v48 = vcombine.high %v44, %v44
    %vm51 = vcmask 1043456
    %v52 = vsel %vm51, %v43, -inf
    %v53 = vrot.slane %v52, 4
    %v54 = vmax.f32 %v52, %v53
    %v55 = vrot.slane %v54, 2
    %v56 = vmax.f32 %v54, %v55
    %v57 = vrot.slane %v56, 1
    %v58 = vmax.f32 %v56, %v57
    %v59 = vsel %vm51, %v47, -inf
    %v60 = vrot.slane %v59, 4
    %v61 = vmax.f32 %v59, %v60
    %v62 = vrot.slane %v61, 2
    %v63 = vmax.f32 %v61, %v62
    %v64 = vrot.slane %v63, 1
    %v65 = vmax.f32 %v63, %v64
    %v66 = vsel %vm51, %v44, -inf
    %v67 = vrot.slane %v66, 4
    %v68 = vmax.f32 %v66, %v67
    %v69 = vrot.slane %v68, 2
    %v70 = vmax.f32 %v68, %v69
    %v71 = vrot.slane %v70, 1
    %v72 = vmax.f32 %v70, %v71
    %v73 = vsel %vm51, %v48, -inf
    %v74 = vrot.slane %v73, 4
    %v75 = vmax.f32 %v73, %v74
    %v76 = vrot.slane %v75, 2
    %v77 = vmax.f32 %v75, %v76
    %v78 = vrot.slane %v77, 1
    %v79 = vmax.f32 %v77, %v78
    %v80 = vsel %vm51, %v43, 0.0
    %v81 = vrot.slane %v80, 4
    %v82 = vadd.f32 %v80, %v81
    %v83 = vrot.slane %v82, 2
    %v84 = vadd.f32 %v82, %v83
    %v85 = vrot.slane %v84, 1
    %v86 = vadd.f32 %v84, %v85
    %v87 = vsel %vm51, %v47, 0.0
    %v88 = vrot.slane %v87, 4
    %v89 = vadd.f32 %v87, %v88
    %v90 = vrot.slane %v89, 2
    %v91 = vadd.f32 %v89, %v90
    %v92 = vrot.slane %v91, 1
    %v93 = vadd.f32 %v91, %v92
    %v94 = vsel %vm51, %v44, 0.0
    %v95 = vrot.slane %v94, 4
    %v96 = vadd.f32 %v94, %v95
    %v97 = vrot.slane %v96, 2
    %v98 = vadd.f32 %v96, %v97
    %v99 = vrot.slane %v98, 1
    %v100 = vadd.f32 %v98, %v99
    %v101 = vsel %vm51, %v48, 0.0
    %v102 = vrot.slane %v101, 4
    %v103 = vadd.f32 %v101, %v102
    %v104 = vrot.slane %v103, 2
    %v105 = vadd.f32 %v103, %v104
    %v106 = vrot.slane %v105, 1
    %v107 = vadd.f32 %v105, %v106
    %v108 = vrcp.pop 4.0
    %v109 = vmul.f32 %v86, %v108
    %v110 = vmul.f32 %v93, %v108
    %v111 = vmul.f32 %v100, %v108
    %v112 = vmul.f32 %v107, %v108
    %113 = vst [vmem:[#allocation2] sm:$0x3] 0.0
    %114 = vst [vmem:[#allocation2 + $0x8] sm:$0x3] 0.0
    %115 = vst [vmem:[#allocation2 + $0x6] sm:$0x3] 0.0
    %116 = vst [vmem:[#allocation2 + $0xe] sm:$0x3] 0.0
    %v121 = vcombine.low %v58, %v65
    %v123 = vunpack.c.l.s4 1983009808
    %v124 = vunpack.c.0.s8 %v123
    %v125 = vlaneseq
    %v126 = vshrl.u32 %v125, 7
    %v127 = vsub.s32 %v124, %v126
    %v128 = vrot.slane %v121, %v127
    %v129 = vcombine.low %v72, %v79
    %v131 = vunpack.c.l.s4 1983009808
    %v132 = vunpack.c.0.s8 %v131
    %v133 = vlaneseq
    %v134 = vshrl.u32 %v133, 7
    %v135 = vsub.s32 %v132, %v134
    %v136 = vrot.slane %v129, %v135
    %vm137 = vcmask 1044484
    %v138 = vsel %vm137, %v128, %v128
    %vm139 = vcmask 1046534
    %v140 = vsel %vm139, %v128, %v138
    %v141 = vrot.slane %v136, 7
    %vm142 = vcmask 1041409
    %v143 = vsel %vm142, %v141, %v140
    %vm144 = vcmask 1043459
    %v145 = vsel %vm144, %v141, %v143
    %vm146 = vcmask 1045509
    %v147 = vsel %vm146, %v141, %v145
    %vm148 = vcmask 1047559
    %v149 = vsel %vm148, %v141, %v147
    %151 = vst [vmem:[#allocation2 + $0x2] sm:$0xf] %v149
    %v156 = vcombine.low %v109, %v110
    %v158 = vunpack.c.l.s4 1983009808
    %v159 = vunpack.c.0.s8 %v158
    %v160 = vlaneseq
    %v161 = vshrl.u32 %v160, 7
    %v162 = vsub.s32 %v159, %v161
    %v163 = vrot.slane %v156, %v162
    %v164 = vcombine.low %v111, %v112
    %v166 = vunpack.c.l.s4 1983009808
    %v167 = vunpack.c.0.s8 %v166
    %v168 = vlaneseq
    %v169 = vshrl.u32 %v168, 7
    %v170 = vsub.s32 %v167, %v169
    %v171 = vrot.slane %v164, %v170
    %v172 = vsel %vm137, %v163, %v163
    %v173 = vsel %vm139, %v163, %v172
    %v174 = vrot.slane %v171, 7
    %v175 = vsel %vm142, %v174, %v173
    %v176 = vsel %vm144, %v174, %v175
    %v177 = vsel %vm146, %v174, %v176
    %v178 = vsel %vm148, %v174, %v177
    %s180 = scalar_lea.vmem [#allocation2], 8
    %181 = vst [vmem:[%s180 + $0x2] sm:$0xf] %v178
    %v182 = vlaneseq
    %v183 = vand.u32 %v182, 127
    %v184 = vadd.s32 %v183, 128
    %vm185 = vcmp.lt.s32.totalorder %v183, 0
    %v186 = vsub.s32 0, %v183
    %v187 = vsel %vm185, %v186, %v183
    %v188 = vshrl.u32 %v187, 4
    %v189 = vand.u32 %v187, 15
    %v190 = vsub.s32 0, %v189
    %v191 = vsel %vm185, %v190, %v189
    %vm192 = vcmp.lt.s32.totalorder %v184, 0
    %v193 = vsub.s32 0, %v184
    %v194 = vsel %vm192, %v193, %v184
    %v195 = vshrl.u32 %v194, 4
    %v196 = vand.u32 %v194, 15
    %v197 = vsub.s32 0, %v196
    %v198 = vsel %vm192, %v197, %v196
    %vm199 = vcmp.ne.s32.totalorder %v191, 0
    %vm200 = vcmp.ne.s32.totalorder %v198, 0
    %vm201 = vcmp.lt.s32.totalorder %v191, 0
    %vm202 = vcmp.lt.s32.totalorder %v198, 0
    %vm203 = vmand %vm201, %vm199
    %vm204 = vmand %vm202, %vm200
    %v205 = vadd.s32 %v191, 16
    %v206 = vadd.s32 %v198, 16
    %v207 = vsel %vm203, %v205, %v191
    %v208 = vsel %vm204, %v206, %v198
    %s209 = sld [smem:[#allocation8]]
    %v210 = vld [vmem:[#allocation2] sm:$0x3f]
    %v211 = vstv %s209
    %v212 = vmul.f32 %v211, %v210
    %s213 = sld [smem:[#allocation8 + $0x7]]
    %v214 = vstv %s213
    %v215 = vmul.f32 %v214, %v210
    %217 = vrot.lane.b32.xlu0 %v215, 112
    %v218 = vpop.permute.xlu0 %217
    %v219 = vrot.slane %v218, 2
    %vm220 = vcmask 916480
    %v221 = vsel %vm220, %v218, %v219
    %v223 = vadd.f32 %v212, %v221
    %s224 = sld [smem:[#allocation8 + $0xe]]
    %v225 = vstv %s224
    %v226 = vmul.f32 %v225, %v210
    %228 = vrot.lane.b32.xlu0 %v226, 96
    %v229 = vpop.permute.xlu0 %228
    %v230 = vrot.slane %v229, 2
    %vm231 = vcmask 785408
    %v232 = vsel %vm231, %v229, %v230
    %v234 = vadd.f32 %v223, %v232
    %s235 = sld [smem:[#allocation8 + $0x15]]
    %v236 = vstv %s235
    %v237 = vmul.f32 %v236, %v210
    %239 = vrot.lane.b32.xlu0 %v237, 80
    %v240 = vpop.permute.xlu0 %239
    %v241 = vrot.slane %v240, 2
    %vm242 = vcmask 654336
    %v243 = vsel %vm242, %v240, %v241
    %v245 = vadd.f32 %v234, %v243
    %s246 = sld [smem:[#allocation8 + $0x1c]]
    %v247 = vld [vmem:[#allocation2 + $0x2] sm:$0x3f]
    %v248 = vstv %s246
    %v249 = vmul.f32 %v248, %v247
    %251 = vrot.lane.b32.xlu0 %v249, 64
    %v252 = vpop.permute.xlu0 %251
    %v253 = vrot.slane %v252, 6
    %vm254 = vcmask 523264
    %v255 = vsel %vm254, %v253, %v252
    %v257 = vadd.f32 %v245, %v255
    %s258 = sld [smem:[#allocation8 + $0x23]]
    %v259 = vstv %s258
    %v260 = vmul.f32 %v259, %v247
    %262 = vrot.lane.b32.xlu0 %v260, 48
    %v263 = vpop.permute.xlu0 %262
    %v264 = vrot.slane %v263, 6
    %vm265 = vcmask 392192
    %v266 = vsel %vm265, %v264, %v263
    %v268 = vadd.f32 %v257, %v266
    %s269 = sld [smem:[#allocation8 + $0x2a]]
    %v270 = vstv %s269
    %v271 = vmul.f32 %v270, %v247
    %273 = vrot.lane.b32.xlu0 %v271, 32
    %v274 = vpop.permute.xlu0 %273
    %v275 = vrot.slane %v274, 6
    %vm276 = vcmask 261120
    %v277 = vsel %vm276, %v275, %v274
    %v279 = vadd.f32 %v268, %v277
    %s280 = sld [smem:[#allocation8 + $0x31]]
    %v281 = vld [vmem:[%s180] sm:$0x3f]
    %v282 = vstv %s280
    %v283 = vmul.f32 %v282, %v281
    %v284 = vadd.f32 %v279, %v283
    %s285 = sld [smem:[#allocation8 + $0x38]]
    %v286 = vstv %s285
    %v287 = vmul.f32 %v286, %v281
    %289 = vrot.lane.b32.xlu0 %v287, 112
    %v290 = vpop.permute.xlu0 %289
    %v291 = vrot.slane %v290, 2
    %v292 = vsel %vm220, %v290, %v291
    %v294 = vadd.f32 %v284, %v292
    %s295 = sld [smem:[#allocation8 + $0x3f]]
    %v296 = vstv %s295
    %v297 = vmul.f32 %v296, %v281
    %299 = vrot.lane.b32.xlu0 %v297, 96
    %v300 = vpop.permute.xlu0 %299
    %v301 = vrot.slane %v300, 2
    %v302 = vsel %vm231, %v300, %v301
    %v304 = vadd.f32 %v294, %v302
    %s305 = sld [smem:[#allocation8 + $0x46]]
    %v306 = vstv %s305
    %v307 = vmul.f32 %v306, %v281
    %309 = vrot.lane.b32.xlu0 %v307, 80
    %v310 = vpop.permute.xlu0 %309
    %v311 = vrot.slane %v310, 2
    %v312 = vsel %vm242, %v310, %v311
    %v314 = vadd.f32 %v304, %v312
    %s315 = sld [smem:[#allocation8 + $0x4d]]
    %v316 = vld [vmem:[%s180 + $0x2] sm:$0x3f]
    %v317 = vstv %s315
    %v318 = vmul.f32 %v317, %v316
    %320 = vrot.lane.b32.xlu0 %v318, 64
    %v321 = vpop.permute.xlu0 %320
    %v322 = vrot.slane %v321, 6
    %v323 = vsel %vm254, %v322, %v321
    %v325 = vadd.f32 %v314, %v323
    %s326 = sld [smem:[#allocation8 + $0x54]]
    %v327 = vstv %s326
    %v328 = vmul.f32 %v327, %v316
    %330 = vrot.lane.b32.xlu0 %v328, 48
    %v331 = vpop.permute.xlu0 %330
    %v332 = vrot.slane %v331, 6
    %v333 = vsel %vm265, %v332, %v331
    %v335 = vadd.f32 %v325, %v333
    %s336 = sld [smem:[#allocation8 + $0x5b]]
    %v337 = vstv %s336
    %v338 = vmul.f32 %v337, %v316
    %340 = vrot.lane.b32.xlu0 %v338, 32
    %v341 = vpop.permute.xlu0 %340
    %v342 = vrot.slane %v341, 6
    %v343 = vsel %vm276, %v342, %v341
    %v345 = vadd.f32 %v335, %v343
    %v346 = vadd.s32 %v207, 4294967293
    %v347 = vadd.s32 %v208, 4294967293
    %vm348 = vcmp.ge.s32.totalorder %v346, 0
    %vm349 = vcmp.ge.s32.totalorder %v347, 0
    %vm350 = vcmp.lt.s32.totalorder %v346, 16
    %vm351 = vcmp.lt.s32.totalorder %v347, 16
    %vm352 = vmand %vm348, %vm350
    %vm353 = vmand %vm349, %vm351
    %v355 = vcombine.high %v345, %v345
    %v357 = vunpack.c.l.s4 1983009808
    %v358 = vunpack.c.0.s8 %v357
    %v359 = vlaneseq
    %v360 = vshrl.u32 %v359, 7
    %v361 = vsub.s32 %v358, %v360
    %v362 = vrot.slane %v345, %v361
    %v364 = vunpack.c.l.s4 1983009808
    %v365 = vunpack.c.0.s8 %v364
    %v366 = vlaneseq
    %v367 = vshrl.u32 %v366, 7
    %v368 = vsub.s32 %v365, %v367
    %v369 = vrot.slane %v355, %v368
    %v370 = vcombine.high %v362, %v362
    %371 = vrot.lane.b32.xlu0 %v362, 51
    %v372 = vpop.permute.xlu0 %371
    %373 = vrot.lane.b32.xlu0 %v370, 51
    %v374 = vpop.permute.xlu0 %373
    %375 = vrot.lane.b32.xlu0 %v369, 51
    %v376 = vpop.permute.xlu0 %375
    %vm377 = vcmask 416768
    %v378 = vsel %vm377, %v372, %v374
    %v379 = vsel %vm377, %v374, %v376
    %v382 = vsel %vm352, %v378, 0.0
    %v383 = vsel %vm353, %v379, 0.0
    %s384 = sld [smem:[#allocation8 + $0x1]]
    %v385 = vld [vmem:[#allocation2] sm:$0x3f]
    %v386 = vstv %s384
    %v387 = vmul.f32 %v386, %v385
    %s388 = sld [smem:[#allocation8 + $0x8]]
    %v389 = vstv %s388
    %v390 = vmul.f32 %v389, %v385
    %392 = vrot.lane.b32.xlu0 %v390, 112
    %v393 = vpop.permute.xlu0 %392
    %v394 = vrot.slane %v393, 2
    %v395 = vsel %vm220, %v393, %v394
    %v397 = vadd.f32 %v387, %v395
    %s398 = sld [smem:[#allocation8 + $0xf]]
    %v399 = vstv %s398
    %v400 = vmul.f32 %v399, %v385
    %402 = vrot.lane.b32.xlu0 %v400, 96
    %v403 = vpop.permute.xlu0 %402
    %v404 = vrot.slane %v403, 2
    %v405 = vsel %vm231, %v403, %v404
    %v407 = vadd.f32 %v397, %v405
    %s408 = sld [smem:[#allocation8 + $0x16]]
    %v409 = vstv %s408
    %v410 = vmul.f32 %v409, %v385
    %412 = vrot.lane.b32.xlu0 %v410, 80
    %v413 = vpop.permute.xlu0 %412
    %v414 = vrot.slane %v413, 2
    %v415 = vsel %vm242, %v413, %v414
    %v417 = vadd.f32 %v407, %v415
    %s418 = sld [smem:[#allocation8 + $0x1d]]
    %v419 = vld [vmem:[#allocation2 + $0x2] sm:$0x3f]
    %v420 = vstv %s418
    %v421 = vmul.f32 %v420, %v419
    %423 = vrot.lane.b32.xlu0 %v421, 64
    %v424 = vpop.permute.xlu0 %423
    %v425 = vrot.slane %v424, 6
    %v426 = vsel %vm254, %v425, %v424
    %v428 = vadd.f32 %v417, %v426
    %s429 = sld [smem:[#allocation8 + $0x24]]
    %v430 = vstv %s429
    %v431 = vmul.f32 %v430, %v419
    %433 = vrot.lane.b32.xlu0 %v431, 48
    %v434 = vpop.permute.xlu0 %433
    %v435 = vrot.slane %v434, 6
    %v436 = vsel %vm265, %v435, %v434
    %v438 = vadd.f32 %v428, %v436
    %s439 = sld [smem:[#allocation8 + $0x2b]]
    %v440 = vstv %s439
    %v441 = vmul.f32 %v440, %v419
    %443 = vrot.lane.b32.xlu0 %v441, 32
    %v444 = vpop.permute.xlu0 %443
    %v445 = vrot.slane %v444, 6
    %v446 = vsel %vm276, %v445, %v444
    %v448 = vadd.f32 %v438, %v446
    %s449 = sld [smem:[#allocation8 + $0x32]]
    %v450 = vld [vmem:[%s180] sm:$0x3f]
    %v451 = vstv %s449
    %v452 = vmul.f32 %v451, %v450
    %v453 = vadd.f32 %v448, %v452
    %s454 = sld [smem:[#allocation8 + $0x39]]
    %v455 = vstv %s454
    %v456 = vmul.f32 %v455, %v450
    %458 = vrot.lane.b32.xlu0 %v456, 112
    %v459 = vpop.permute.xlu0 %458
    %v460 = vrot.slane %v459, 2
    %v461 = vsel %vm220, %v459, %v460
    %v463 = vadd.f32 %v453, %v461
    %s464 = sld [smem:[#allocation8 + $0x40]]
    %v465 = vstv %s464
    %v466 = vmul.f32 %v465, %v450
    %468 = vrot.lane.b32.xlu0 %v466, 96
    %v469 = vpop.permute.xlu0 %468
    %v470 = vrot.slane %v469, 2
    %v471 = vsel %vm231, %v469, %v470
    %v473 = vadd.f32 %v463, %v471
    %s474 = sld [smem:[#allocation8 + $0x47]]
    %v475 = vstv %s474
    %v476 = vmul.f32 %v475, %v450
    %478 = vrot.lane.b32.xlu0 %v476, 80
    %v479 = vpop.permute.xlu0 %478
    %v480 = vrot.slane %v479, 2
    %v481 = vsel %vm242, %v479, %v480
    %v483 = vadd.f32 %v473, %v481
    %s484 = sld [smem:[#allocation8 + $0x4e]]
    %v485 = vld [vmem:[%s180 + $0x2] sm:$0x3f]
    %v486 = vstv %s484
    %v487 = vmul.f32 %v486, %v485
    %489 = vrot.lane.b32.xlu0 %v487, 64
    %v490 = vpop.permute.xlu0 %489
    %v491 = vrot.slane %v490, 6
    %v492 = vsel %vm254, %v491, %v490
    %v494 = vadd.f32 %v483, %v492
    %s495 = sld [smem:[#allocation8 + $0x55]]
    %v496 = vstv %s495
    %v497 = vmul.f32 %v496, %v485
    %499 = vrot.lane.b32.xlu0 %v497, 48
    %v500 = vpop.permute.xlu0 %499
    %v501 = vrot.slane %v500, 6
    %v502 = vsel %vm265, %v501, %v500
    %v504 = vadd.f32 %v494, %v502
    %s505 = sld [smem:[#allocation8 + $0x5c]]
    %v506 = vstv %s505
    %v507 = vmul.f32 %v506, %v485
    %509 = vrot.lane.b32.xlu0 %v507, 32
    %v510 = vpop.permute.xlu0 %509
    %v511 = vrot.slane %v510, 6
    %v512 = vsel %vm276, %v511, %v510
    %v514 = vadd.f32 %v504, %v512
    %v515 = vadd.s32 %v207, 4294967294
    %v516 = vadd.s32 %v208, 4294967294
    %vm517 = vcmp.ge.s32.totalorder %v515, 0
    %vm518 = vcmp.ge.s32.totalorder %v516, 0
    %vm519 = vcmp.lt.s32.totalorder %v515, 16
    %vm520 = vcmp.lt.s32.totalorder %v516, 16
    %vm521 = vmand %vm517, %vm519
    %vm522 = vmand %vm518, %vm520
    %v524 = vcombine.high %v514, %v514
    %v526 = vunpack.c.l.s4 1983009808
    %v527 = vunpack.c.0.s8 %v526
    %v528 = vlaneseq
    %v529 = vshrl.u32 %v528, 7
    %v530 = vsub.s32 %v527, %v529
    %v531 = vrot.slane %v514, %v530
    %v533 = vunpack.c.l.s4 1983009808
    %v534 = vunpack.c.0.s8 %v533
    %v535 = vlaneseq
    %v536 = vshrl.u32 %v535, 7
    %v537 = vsub.s32 %v534, %v536
    %v538 = vrot.slane %v524, %v537
    %v539 = vcombine.high %v531, %v531
    %540 = vrot.lane.b32.xlu0 %v531, 50
    %v541 = vpop.permute.xlu0 %540
    %542 = vrot.lane.b32.xlu0 %v539, 50
    %v543 = vpop.permute.xlu0 %542
    %544 = vrot.lane.b32.xlu0 %v538, 50
    %v545 = vpop.permute.xlu0 %544
    %vm546 = vcmask 408576
    %v547 = vsel %vm546, %v541, %v543
    %v548 = vsel %vm546, %v543, %v545
    %v551 = vsel %vm521, %v547, 0.0
    %v552 = vsel %vm522, %v548, 0.0
    %s553 = sld [smem:[#allocation8 + $0x2]]
    %v554 = vld [vmem:[#allocation2] sm:$0x3f]
    %v555 = vstv %s553
    %v556 = vmul.f32 %v555, %v554
    %s557 = sld [smem:[#allocation8 + $0x9]]
    %v558 = vstv %s557
    %v559 = vmul.f32 %v558, %v554
    %561 = vrot.lane.b32.xlu0 %v559, 112
    %v562 = vpop.permute.xlu0 %561
    %v563 = vrot.slane %v562, 2
    %v564 = vsel %vm220, %v562, %v563
    %v566 = vadd.f32 %v556, %v564
    %s567 = sld [smem:[#allocation8 + $0x10]]
    %v568 = vstv %s567
    %v569 = vmul.f32 %v568, %v554
    %571 = vrot.lane.b32.xlu0 %v569, 96
    %v572 = vpop.permute.xlu0 %571
    %v573 = vrot.slane %v572, 2
    %v574 = vsel %vm231, %v572, %v573
    %v576 = vadd.f32 %v566, %v574
    %s577 = sld [smem:[#allocation8 + $0x17]]
    %v578 = vstv %s577
    %v579 = vmul.f32 %v578, %v554
    %581 = vrot.lane.b32.xlu0 %v579, 80
    %v582 = vpop.permute.xlu0 %581
    %v583 = vrot.slane %v582, 2
    %v584 = vsel %vm242, %v582, %v583
    %v586 = vadd.f32 %v576, %v584
    %s587 = sld [smem:[#allocation8 + $0x1e]]
    %v588 = vld [vmem:[#allocation2 + $0x2] sm:$0x3f]
    %v589 = vstv %s587
    %v590 = vmul.f32 %v589, %v588
    %592 = vrot.lane.b32.xlu0 %v590, 64
    %v593 = vpop.permute.xlu0 %592
    %v594 = vrot.slane %v593, 6
    %v595 = vsel %vm254, %v594, %v593
    %v597 = vadd.f32 %v586, %v595
    %s598 = sld [smem:[#allocation8 + $0x25]]
    %v599 = vstv %s598
    %v600 = vmul.f32 %v599, %v588
    %602 = vrot.lane.b32.xlu0 %v600, 48
    %v603 = vpop.permute.xlu0 %602
    %v604 = vrot.slane %v603, 6
    %v605 = vsel %vm265, %v604, %v603
    %v607 = vadd.f32 %v597, %v605
    %s608 = sld [smem:[#allocation8 + $0x2c]]
    %v609 = vstv %s608
    %v610 = vmul.f32 %v609, %v588
    %612 = vrot.lane.b32.xlu0 %v610, 32
    %v613 = vpop.permute.xlu0 %612
    %v614 = vrot.slane %v613, 6
    %v615 = vsel %vm276, %v614, %v613
    %v617 = vadd.f32 %v607, %v615
    %s618 = sld [smem:[#allocation8 + $0x33]]
    %v619 = vld [vmem:[%s180] sm:$0x3f]
    %v620 = vstv %s618
    %v621 = vmul.f32 %v620, %v619
    %v622 = vadd.f32 %v617, %v621
    %s623 = sld [smem:[#allocation8 + $0x3a]]
    %v624 = vstv %s623
    %v625 = vmul.f32 %v624, %v619
    %627 = vrot.lane.b32.xlu0 %v625, 112
    %v628 = vpop.permute.xlu0 %627
    %v629 = vrot.slane %v628, 2
    %v630 = vsel %vm220, %v628, %v629
    %v632 = vadd.f32 %v622, %v630
    %s633 = sld [smem:[#allocation8 + $0x41]]
    %v634 = vstv %s633
    %v635 = vmul.f32 %v634, %v619
    %637 = vrot.lane.b32.xlu0 %v635, 96
    %v638 = vpop.permute.xlu0 %637
    %v639 = vrot.slane %v638, 2
    %v640 = vsel %vm231, %v638, %v639
    %v642 = vadd.f32 %v632, %v640
    %s643 = sld [smem:[#allocation8 + $0x48]]
    %v644 = vstv %s643
    %v645 = vmul.f32 %v644, %v619
    %647 = vrot.lane.b32.xlu0 %v645, 80
    %v648 = vpop.permute.xlu0 %647
    %v649 = vrot.slane %v648, 2
    %v650 = vsel %vm242, %v648, %v649
    %v652 = vadd.f32 %v642, %v650
    %s653 = sld [smem:[#allocation8 + $0x4f]]
    %v654 = vld [vmem:[%s180 + $0x2] sm:$0x3f]
    %v655 = vstv %s653
    %v656 = vmul.f32 %v655, %v654
    %658 = vrot.lane.b32.xlu0 %v656, 64
    %v659 = vpop.permute.xlu0 %658
    %v660 = vrot.slane %v659, 6
    %v661 = vsel %vm254, %v660, %v659
    %v663 = vadd.f32 %v652, %v661
    %s664 = sld [smem:[#allocation8 + $0x56]]
    %v665 = vstv %s664
    %v666 = vmul.f32 %v665, %v654
    %668 = vrot.lane.b32.xlu0 %v666, 48
    %v669 = vpop.permute.xlu0 %668
    %v670 = vrot.slane %v669, 6
    %v671 = vsel %vm265, %v670, %v669
    %v673 = vadd.f32 %v663, %v671
    %s674 = sld [smem:[#allocation8 + $0x5d]]
    %v675 = vstv %s674
    %v676 = vmul.f32 %v675, %v654
    %678 = vrot.lane.b32.xlu0 %v676, 32
    %v679 = vpop.permute.xlu0 %678
    %v680 = vrot.slane %v679, 6
    %v681 = vsel %vm276, %v680, %v679
    %v683 = vadd.f32 %v673, %v681
    %v684 = vadd.s32 %v207, 4294967295
    %v685 = vadd.s32 %v208, 4294967295
    %vm686 = vcmp.ge.s32.totalorder %v684, 0
    %vm687 = vcmp.ge.s32.totalorder %v685, 0
    %vm688 = vcmp.lt.s32.totalorder %v684, 16
    %vm689 = vcmp.lt.s32.totalorder %v685, 16
    %vm690 = vmand %vm686, %vm688
    %vm691 = vmand %vm687, %vm689
    %v693 = vcombine.high %v683, %v683
    %v695 = vunpack.c.l.s4 1983009808
    %v696 = vunpack.c.0.s8 %v695
    %v697 = vlaneseq
    %v698 = vshrl.u32 %v697, 7
    %v699 = vsub.s32 %v696, %v698
    %v700 = vrot.slane %v683, %v699
    %v702 = vunpack.c.l.s4 1983009808
    %v703 = vunpack.c.0.s8 %v702
    %v704 = vlaneseq
    %v705 = vshrl.u32 %v704, 7
    %v706 = vsub.s32 %v703, %v705
    %v707 = vrot.slane %v693, %v706
    %v708 = vcombine.high %v700, %v700
    %709 = vrot.lane.b32.xlu0 %v700, 49
    %v710 = vpop.permute.xlu0 %709
    %711 = vrot.lane.b32.xlu0 %v708, 49
    %v712 = vpop.permute.xlu0 %711
    %713 = vrot.lane.b32.xlu0 %v707, 49
    %v714 = vpop.permute.xlu0 %713
    %vm715 = vcmask 400384
    %v716 = vsel %vm715, %v710, %v712
    %v717 = vsel %vm715, %v712, %v714
    %v720 = vsel %vm690, %v716, 0.0
    %v721 = vsel %vm691, %v717, 0.0
    %s722 = sld [smem:[#allocation8 + $0x3]]
    %v723 = vld [vmem:[#allocation2] sm:$0x3f]
    %v724 = vstv %s722
    %v725 = vmul.f32 %v724, %v723
    %s726 = sld [smem:[#allocation8 + $0xa]]
    %v727 = vstv %s726
    %v728 = vmul.f32 %v727, %v723
    %730 = vrot.lane.b32.xlu0 %v728, 112
    %v731 = vpop.permute.xlu0 %730
    %v732 = vrot.slane %v731, 2
    %v733 = vsel %vm220, %v731, %v732
    %v735 = vadd.f32 %v725, %v733
    %s736 = sld [smem:[#allocation8 + $0x11]]
    %v737 = vstv %s736
    %v738 = vmul.f32 %v737, %v723
    %740 = vrot.lane.b32.xlu0 %v738, 96
    %v741 = vpop.permute.xlu0 %740
    %v742 = vrot.slane %v741, 2
    %v743 = vsel %vm231, %v741, %v742
    %v745 = vadd.f32 %v735, %v743
    %s746 = sld [smem:[#allocation8 + $0x18]]
    %v747 = vld [vmem:[#allocation2 + $0x2] sm:$0xf]
    %v748 = vstv %s746
    %v749 = vmul.f32 %v748, %v747
    %751 = vrot.lane.b32.xlu0 %v749, 80
    %v752 = vpop.permute.xlu0 %751
    %v753 = vrot.slane %v752, 6
    %v754 = vsel %vm242, %v753, %v752
    %v756 = vadd.f32 %v745, %v754
    %s757 = sld [smem:[#allocation8 + $0x1f]]
    %v758 = vld [vmem:[#allocation2 + $0x2] sm:$0x3f]
    %v759 = vstv %s757
    %v760 = vmul.f32 %v759, %v758
    %762 = vrot.lane.b32.xlu0 %v760, 64
    %v763 = vpop.permute.xlu0 %762
    %v764 = vrot.slane %v763, 6
    %v765 = vsel %vm254, %v764, %v763
    %v767 = vadd.f32 %v756, %v765
    %s768 = sld [smem:[#allocation8 + $0x26]]
    %v769 = vstv %s768
    %v770 = vmul.f32 %v769, %v758
    %772 = vrot.lane.b32.xlu0 %v770, 48
    %v773 = vpop.permute.xlu0 %772
    %v774 = vrot.slane %v773, 6
    %v775 = vsel %vm265, %v774, %v773
    %v777 = vadd.f32 %v767, %v775
    %s778 = sld [smem:[#allocation8 + $0x2d]]
    %v779 = vstv %s778
    %v780 = vmul.f32 %v779, %v758
    %782 = vrot.lane.b32.xlu0 %v780, 32
    %v783 = vpop.permute.xlu0 %782
    %v784 = vrot.slane %v783, 6
    %v785 = vsel %vm276, %v784, %v783
    %v787 = vadd.f32 %v777, %v785
    %s788 = sld [smem:[#allocation8 + $0x34]]
    %v789 = vld [vmem:[%s180] sm:$0x3f]
    %v790 = vstv %s788
    %v791 = vmul.f32 %v790, %v789
    %v792 = vadd.f32 %v787, %v791
    %s793 = sld [smem:[#allocation8 + $0x3b]]
    %v794 = vstv %s793
    %v795 = vmul.f32 %v794, %v789
    %797 = vrot.lane.b32.xlu0 %v795, 112
    %v798 = vpop.permute.xlu0 %797
    %v799 = vrot.slane %v798, 2
    %v800 = vsel %vm220, %v798, %v799
    %v802 = vadd.f32 %v792, %v800
    %s803 = sld [smem:[#allocation8 + $0x42]]
    %v804 = vstv %s803
    %v805 = vmul.f32 %v804, %v789
    %807 = vrot.lane.b32.xlu0 %v805, 96
    %v808 = vpop.permute.xlu0 %807
    %v809 = vrot.slane %v808, 2
    %v810 = vsel %vm231, %v808, %v809
    %v812 = vadd.f32 %v802, %v810
    %s813 = sld [smem:[#allocation8 + $0x49]]
    %v814 = vld [vmem:[%s180 + $0x2] sm:$0xf]
    %v815 = vstv %s813
    %v816 = vmul.f32 %v815, %v814
    %818 = vrot.lane.b32.xlu0 %v816, 80
    %v819 = vpop.permute.xlu0 %818
    %v820 = vrot.slane %v819, 6
    %v821 = vsel %vm242, %v820, %v819
    %v823 = vadd.f32 %v812, %v821
    %s824 = sld [smem:[#allocation8 + $0x50]]
    %v825 = vld [vmem:[%s180 + $0x2] sm:$0x3f]
    %v826 = vstv %s824
    %v827 = vmul.f32 %v826, %v825
    %829 = vrot.lane.b32.xlu0 %v827, 64
    %v830 = vpop.permute.xlu0 %829
    %v831 = vrot.slane %v830, 6
    %v832 = vsel %vm254, %v831, %v830
    %v834 = vadd.f32 %v823, %v832
    %s835 = sld [smem:[#allocation8 + $0x57]]
    %v836 = vstv %s835
    %v837 = vmul.f32 %v836, %v825
    %839 = vrot.lane.b32.xlu0 %v837, 48
    %v840 = vpop.permute.xlu0 %839
    %v841 = vrot.slane %v840, 6
    %v842 = vsel %vm265, %v841, %v840
    %v844 = vadd.f32 %v834, %v842
    %s845 = sld [smem:[#allocation8 + $0x5e]]
    %v846 = vstv %s845
    %v847 = vmul.f32 %v846, %v825
    %849 = vrot.lane.b32.xlu0 %v847, 32
    %v850 = vpop.permute.xlu0 %849
    %v851 = vrot.slane %v850, 6
    %v852 = vsel %vm276, %v851, %v850
    %v854 = vadd.f32 %v844, %v852
    %s855 = sld [smem:[#allocation8 + $0x4]]
    %v856 = vstv %s855
    %v857 = vmul.f32 %v856, %v723
    %s858 = sld [smem:[#allocation8 + $0xb]]
    %v859 = vstv %s858
    %v860 = vmul.f32 %v859, %v723
    %862 = vrot.lane.b32.xlu0 %v860, 112
    %v863 = vpop.permute.xlu0 %862
    %v864 = vrot.slane %v863, 2
    %v865 = vsel %vm220, %v863, %v864
    %v867 = vadd.f32 %v857, %v865
    %s868 = sld [smem:[#allocation8 + $0x12]]
    %v869 = vstv %s868
    %v870 = vmul.f32 %v869, %v723
    %872 = vrot.lane.b32.xlu0 %v870, 96
    %v873 = vpop.permute.xlu0 %872
    %v874 = vrot.slane %v873, 2
    %v875 = vsel %vm231, %v873, %v874
    %v877 = vadd.f32 %v867, %v875
    %s878 = sld [smem:[#allocation8 + $0x19]]
    %v879 = vstv %s878
    %v880 = vmul.f32 %v879, %v758
    %882 = vrot.lane.b32.xlu0 %v880, 80
    %v883 = vpop.permute.xlu0 %882
    %v884 = vrot.slane %v883, 6
    %v885 = vsel %vm242, %v884, %v883
    %v887 = vadd.f32 %v877, %v885
    %s888 = sld [smem:[#allocation8 + $0x20]]
    %v889 = vstv %s888
    %v890 = vmul.f32 %v889, %v758
    %892 = vrot.lane.b32.xlu0 %v890, 64
    %v893 = vpop.permute.xlu0 %892
    %v894 = vrot.slane %v893, 6
    %v895 = vsel %vm254, %v894, %v893
    %v897 = vadd.f32 %v887, %v895
    %s898 = sld [smem:[#allocation8 + $0x27]]
    %v899 = vstv %s898
    %v900 = vmul.f32 %v899, %v758
    %902 = vrot.lane.b32.xlu0 %v900, 48
    %v903 = vpop.permute.xlu0 %902
    %v904 = vrot.slane %v903, 6
    %v905 = vsel %vm265, %v904, %v903
    %v907 = vadd.f32 %v897, %v905
    %s908 = sld [smem:[#allocation8 + $0x2e]]
    %v909 = vstv %s908
    %v910 = vmul.f32 %v909, %v758
    %912 = vrot.lane.b32.xlu0 %v910, 32
    %v913 = vpop.permute.xlu0 %912
    %v914 = vrot.slane %v913, 6
    %v915 = vsel %vm276, %v914, %v913
    %v917 = vadd.f32 %v907, %v915
    %s918 = sld [smem:[#allocation8 + $0x35]]
    %v919 = vstv %s918
    %v920 = vmul.f32 %v919, %v789
    %v921 = vadd.f32 %v917, %v920
    %s922 = sld [smem:[#allocation8 + $0x3c]]
    %v923 = vstv %s922
    %v924 = vmul.f32 %v923, %v789
    %926 = vrot.lane.b32.xlu0 %v924, 112
    %v927 = vpop.permute.xlu0 %926
    %v928 = vrot.slane %v927, 2
    %v929 = vsel %vm220, %v927, %v928
    %v931 = vadd.f32 %v921, %v929
    %s932 = sld [smem:[#allocation8 + $0x43]]
    %v933 = vstv %s932
    %v934 = vmul.f32 %v933, %v789
    %936 = vrot.lane.b32.xlu0 %v934, 96
    %v937 = vpop.permute.xlu0 %936
    %v938 = vrot.slane %v937, 2
    %v939 = vsel %vm231, %v937, %v938
    %v941 = vadd.f32 %v931, %v939
    %s942 = sld [smem:[#allocation8 + $0x4a]]
    %v943 = vstv %s942
    %v944 = vmul.f32 %v943, %v825
    %946 = vrot.lane.b32.xlu0 %v944, 80
    %v947 = vpop.permute.xlu0 %946
    %v948 = vrot.slane %v947, 6
    %v949 = vsel %vm242, %v948, %v947
    %v951 = vadd.f32 %v941, %v949
    %s952 = sld [smem:[#allocation8 + $0x51]]
    %v953 = vstv %s952
    %v954 = vmul.f32 %v953, %v825
    %956 = vrot.lane.b32.xlu0 %v954, 64
    %v957 = vpop.permute.xlu0 %956
    %v958 = vrot.slane %v957, 6
    %v959 = vsel %vm254, %v958, %v957
    %v961 = vadd.f32 %v951, %v959
    %s962 = sld [smem:[#allocation8 + $0x58]]
    %v963 = vstv %s962
    %v964 = vmul.f32 %v963, %v825
    %966 = vrot.lane.b32.xlu0 %v964, 48
    %v967 = vpop.permute.xlu0 %966
    %v968 = vrot.slane %v967, 6
    %v969 = vsel %vm265, %v968, %v967
    %v971 = vadd.f32 %v961, %v969
    %s972 = sld [smem:[#allocation8 + $0x5f]]
    %v973 = vstv %s972
    %v974 = vmul.f32 %v973, %v825
    %976 = vrot.lane.b32.xlu0 %v974, 32
    %v977 = vpop.permute.xlu0 %976
    %v978 = vrot.slane %v977, 6
    %v979 = vsel %vm276, %v978, %v977
    %v981 = vadd.f32 %v971, %v979
    %v982 = vadd.s32 %v207, 1
    %v983 = vadd.s32 %v208, 1
    %vm984 = vcmp.ge.s32.totalorder %v982, 0
    %vm985 = vcmp.ge.s32.totalorder %v983, 0
    %vm986 = vcmp.lt.s32.totalorder %v982, 16
    %vm987 = vcmp.lt.s32.totalorder %v983, 16
    %vm988 = vmand %vm984, %vm986
    %vm989 = vmand %vm985, %vm987
    %v991 = vcombine.high %v981, %v981
    %v993 = vunpack.c.l.s4 1983009808
    %v994 = vunpack.c.0.s8 %v993
    %v995 = vlaneseq
    %v996 = vshrl.u32 %v995, 7
    %v997 = vsub.s32 %v994, %v996
    %v998 = vrot.slane %v981, %v997
    %v1000 = vunpack.c.l.s4 1983009808
    %v1001 = vunpack.c.0.s8 %v1000
    %v1002 = vlaneseq
    %v1003 = vshrl.u32 %v1002, 7
    %v1004 = vsub.s32 %v1001, %v1003
    %v1005 = vrot.slane %v991, %v1004
    %v1006 = vcombine.high %v998, %v998
    %1007 = vrot.lane.b32.xlu0 %v998, 47
    %v1008 = vpop.permute.xlu0 %1007
    %1009 = vrot.lane.b32.xlu0 %v1006, 47
    %v1010 = vpop.permute.xlu0 %1009
    %1011 = vrot.lane.b32.xlu0 %v1005, 47
    %v1012 = vpop.permute.xlu0 %1011
    %vm1013 = vcmask 384000
    %v1014 = vsel %vm1013, %v1008, %v1010
    %v1015 = vsel %vm1013, %v1010, %v1012
    %v1018 = vsel %vm988, %v1014, 0.0
    %v1019 = vsel %vm989, %v1015, 0.0
    %s1020 = sld [smem:[#allocation8 + $0x5]]
    %v1021 = vld [vmem:[#allocation2] sm:$0x3f]
    %v1022 = vstv %s1020
    %v1023 = vmul.f32 %v1022, %v1021
    %s1024 = sld [smem:[#allocation8 + $0xc]]
    %v1025 = vstv %s1024
    %v1026 = vmul.f32 %v1025, %v1021
    %1028 = vrot.lane.b32.xlu0 %v1026, 112
    %v1029 = vpop.permute.xlu0 %1028
    %v1030 = vrot.slane %v1029, 2
    %v1031 = vsel %vm220, %v1029, %v1030
    %v1033 = vadd.f32 %v1023, %v1031
    %s1034 = sld [smem:[#allocation8 + $0x13]]
    %v1035 = vstv %s1034
    %v1036 = vmul.f32 %v1035, %v1021
    %1038 = vrot.lane.b32.xlu0 %v1036, 96
    %v1039 = vpop.permute.xlu0 %1038
    %v1040 = vrot.slane %v1039, 2
    %v1041 = vsel %vm231, %v1039, %v1040
    %v1043 = vadd.f32 %v1033, %v1041
    %s1044 = sld [smem:[#allocation8 + $0x1a]]
    %v1045 = vld [vmem:[#allocation2 + $0x2] sm:$0x3f]
    %v1046 = vstv %s1044
    %v1047 = vmul.f32 %v1046, %v1045
    %1049 = vrot.lane.b32.xlu0 %v1047, 80
    %v1050 = vpop.permute.xlu0 %1049
    %v1051 = vrot.slane %v1050, 6
    %v1052 = vsel %vm242, %v1051, %v1050
    %v1054 = vadd.f32 %v1043, %v1052
    %s1055 = sld [smem:[#allocation8 + $0x21]]
    %v1056 = vstv %s1055
    %v1057 = vmul.f32 %v1056, %v1045
    %1059 = vrot.lane.b32.xlu0 %v1057, 64
    %v1060 = vpop.permute.xlu0 %1059
    %v1061 = vrot.slane %v1060, 6
    %v1062 = vsel %vm254, %v1061, %v1060
    %v1064 = vadd.f32 %v1054, %v1062
    %s1065 = sld [smem:[#allocation8 + $0x28]]
    %v1066 = vstv %s1065
    %v1067 = vmul.f32 %v1066, %v1045
    %1069 = vrot.lane.b32.xlu0 %v1067, 48
    %v1070 = vpop.permute.xlu0 %1069
    %v1071 = vrot.slane %v1070, 6
    %v1072 = vsel %vm265, %v1071, %v1070
    %v1074 = vadd.f32 %v1064, %v1072
    %s1075 = sld [smem:[#allocation8 + $0x2f]]
    %v1076 = vstv %s1075
    %v1077 = vmul.f32 %v1076, %v1045
    %1079 = vrot.lane.b32.xlu0 %v1077, 32
    %v1080 = vpop.permute.xlu0 %1079
    %v1081 = vrot.slane %v1080, 6
    %v1082 = vsel %vm276, %v1081, %v1080
    %v1084 = vadd.f32 %v1074, %v1082
    %s1085 = sld [smem:[#allocation8 + $0x36]]
    %v1086 = vld [vmem:[%s180] sm:$0x3f]
    %v1087 = vstv %s1085
    %v1088 = vmul.f32 %v1087, %v1086
    %v1089 = vadd.f32 %v1084, %v1088
    %s1090 = sld [smem:[#allocation8 + $0x3d]]
    %v1091 = vstv %s1090
    %v1092 = vmul.f32 %v1091, %v1086
    %1094 = vrot.lane.b32.xlu0 %v1092, 112
    %v1095 = vpop.permute.xlu0 %1094
    %v1096 = vrot.slane %v1095, 2
    %v1097 = vsel %vm220, %v1095, %v1096
    %v1099 = vadd.f32 %v1089, %v1097
    %s1100 = sld [smem:[#allocation8 + $0x44]]
    %v1101 = vstv %s1100
    %v1102 = vmul.f32 %v1101, %v1086
    %1104 = vrot.lane.b32.xlu0 %v1102, 96
    %v1105 = vpop.permute.xlu0 %1104
    %v1106 = vrot.slane %v1105, 2
    %v1107 = vsel %vm231, %v1105, %v1106
    %v1109 = vadd.f32 %v1099, %v1107
    %s1110 = sld [smem:[#allocation8 + $0x4b]]
    %v1111 = vld [vmem:[%s180 + $0x2] sm:$0x3f]
    %v1112 = vstv %s1110
    %v1113 = vmul.f32 %v1112, %v1111
    %1115 = vrot.lane.b32.xlu0 %v1113, 80
    %v1116 = vpop.permute.xlu0 %1115
    %v1117 = vrot.slane %v1116, 6
    %v1118 = vsel %vm242, %v1117, %v1116
    %v1120 = vadd.f32 %v1109, %v1118
    %s1121 = sld [smem:[#allocation8 + $0x52]]
    %v1122 = vstv %s1121
    %v1123 = vmul.f32 %v1122, %v1111
    %1125 = vrot.lane.b32.xlu0 %v1123, 64
    %v1126 = vpop.permute.xlu0 %1125
    %v1127 = vrot.slane %v1126, 6
    %v1128 = vsel %vm254, %v1127, %v1126
    %v1130 = vadd.f32 %v1120, %v1128
    %s1131 = sld [smem:[#allocation8 + $0x59]]
    %v1132 = vstv %s1131
    %v1133 = vmul.f32 %v1132, %v1111
    %1135 = vrot.lane.b32.xlu0 %v1133, 48
    %v1136 = vpop.permute.xlu0 %1135
    %v1137 = vrot.slane %v1136, 6
    %v1138 = vsel %vm265, %v1137, %v1136
    %v1140 = vadd.f32 %v1130, %v1138
    %s1141 = sld [smem:[#allocation8 + $0x60]]
    %v1142 = vstv %s1141
    %v1143 = vmul.f32 %v1142, %v1111
    %1145 = vrot.lane.b32.xlu0 %v1143, 32
    %v1146 = vpop.permute.xlu0 %1145
    %v1147 = vrot.slane %v1146, 6
    %v1148 = vsel %vm276, %v1147, %v1146
    %v1150 = vadd.f32 %v1140, %v1148
    %v1151 = vadd.s32 %v207, 2
    %v1152 = vadd.s32 %v208, 2
    %vm1153 = vcmp.ge.s32.totalorder %v1151, 0
    %vm1154 = vcmp.ge.s32.totalorder %v1152, 0
    %vm1155 = vcmp.lt.s32.totalorder %v1151, 16
    %vm1156 = vcmp.lt.s32.totalorder %v1152, 16
    %vm1157 = vmand %vm1153, %vm1155
    %vm1158 = vmand %vm1154, %vm1156
    %v1160 = vcombine.high %v1150, %v1150
    %v1162 = vunpack.c.l.s4 1983009808
    %v1163 = vunpack.c.0.s8 %v1162
    %v1164 = vlaneseq
    %v1165 = vshrl.u32 %v1164, 7
    %v1166 = vsub.s32 %v1163, %v1165
    %v1167 = vrot.slane %v1150, %v1166
    %v1169 = vunpack.c.l.s4 1983009808
    %v1170 = vunpack.c.0.s8 %v1169
    %v1171 = vlaneseq
    %v1172 = vshrl.u32 %v1171, 7
    %v1173 = vsub.s32 %v1170, %v1172
    %v1174 = vrot.slane %v1160, %v1173
    %v1175 = vcombine.high %v1167, %v1167
    %1176 = vrot.lane.b32.xlu0 %v1167, 46
    %v1177 = vpop.permute.xlu0 %1176
    %1178 = vrot.lane.b32.xlu0 %v1175, 46
    %v1179 = vpop.permute.xlu0 %1178
    %1180 = vrot.lane.b32.xlu0 %v1174, 46
    %v1181 = vpop.permute.xlu0 %1180
    %vm1182 = vcmask 375808
    %v1183 = vsel %vm1182, %v1177, %v1179
    %v1184 = vsel %vm1182, %v1179, %v1181
    %v1187 = vsel %vm1157, %v1183, 0.0
    %v1188 = vsel %vm1158, %v1184, 0.0
    %s1189 = sld [smem:[#allocation8 + $0x6]]
    %v1190 = vld [vmem:[#allocation2] sm:$0x3f]
    %v1191 = vstv %s1189
    %v1192 = vmul.f32 %v1191, %v1190
    %s1193 = sld [smem:[#allocation8 + $0xd]]
    %v1194 = vstv %s1193
    %v1195 = vmul.f32 %v1194, %v1190
    %1197 = vrot.lane.b32.xlu0 %v1195, 112
    %v1198 = vpop.permute.xlu0 %1197
    %v1199 = vrot.slane %v1198, 2
    %v1200 = vsel %vm220, %v1198, %v1199
    %v1202 = vadd.f32 %v1192, %v1200
    %s1203 = sld [smem:[#allocation8 + $0x14]]
    %v1204 = vstv %s1203
    %v1205 = vmul.f32 %v1204, %v1190
    %1207 = vrot.lane.b32.xlu0 %v1205, 96
    %v1208 = vpop.permute.xlu0 %1207
    %v1209 = vrot.slane %v1208, 2
    %v1210 = vsel %vm231, %v1208, %v1209
    %v1212 = vadd.f32 %v1202, %v1210
    %s1213 = sld [smem:[#allocation8 + $0x1b]]
    %v1214 = vld [vmem:[#allocation2 + $0x2] sm:$0x3f]
    %v1215 = vstv %s1213
    %v1216 = vmul.f32 %v1215, %v1214
    %1218 = vrot.lane.b32.xlu0 %v1216, 80
    %v1219 = vpop.permute.xlu0 %1218
    %v1220 = vrot.slane %v1219, 6
    %v1221 = vsel %vm242, %v1220, %v1219
    %v1223 = vadd.f32 %v1212, %v1221
    %s1224 = sld [smem:[#allocation8 + $0x22]]
    %v1225 = vstv %s1224
    %v1226 = vmul.f32 %v1225, %v1214
    %1228 = vrot.lane.b32.xlu0 %v1226, 64
    %v1229 = vpop.permute.xlu0 %1228
    %v1230 = vrot.slane %v1229, 6
    %v1231 = vsel %vm254, %v1230, %v1229
    %v1233 = vadd.f32 %v1223, %v1231
    %s1234 = sld [smem:[#allocation8 + $0x29]]
    %v1235 = vstv %s1234
    %v1236 = vmul.f32 %v1235, %v1214
    %1238 = vrot.lane.b32.xlu0 %v1236, 48
    %v1239 = vpop.permute.xlu0 %1238
    %v1240 = vrot.slane %v1239, 6
    %v1241 = vsel %vm265, %v1240, %v1239
    %v1243 = vadd.f32 %v1233, %v1241
    %s1244 = sld [smem:[#allocation8 + $0x30]]
    %v1245 = vstv %s1244
    %v1246 = vmul.f32 %v1245, %v1214
    %1248 = vrot.lane.b32.xlu0 %v1246, 32
    %v1249 = vpop.permute.xlu0 %1248
    %v1250 = vrot.slane %v1249, 6
    %v1251 = vsel %vm276, %v1250, %v1249
    %v1253 = vadd.f32 %v1243, %v1251
    %s1254 = sld [smem:[#allocation8 + $0x37]]
    %v1255 = vld [vmem:[%s180] sm:$0x3f]
    %v1256 = vstv %s1254
    %v1257 = vmul.f32 %v1256, %v1255
    %v1258 = vadd.f32 %v1253, %v1257
    %s1259 = sld [smem:[#allocation8 + $0x3e]]
    %v1260 = vstv %s1259
    %v1261 = vmul.f32 %v1260, %v1255
    %1263 = vrot.lane.b32.xlu0 %v1261, 112
    %v1264 = vpop.permute.xlu0 %1263
    %v1265 = vrot.slane %v1264, 2
    %v1266 = vsel %vm220, %v1264, %v1265
    %v1268 = vadd.f32 %v1258, %v1266
    %s1269 = sld [smem:[#allocation8 + $0x45]]
    %v1270 = vstv %s1269
    %v1271 = vmul.f32 %v1270, %v1255
    %1273 = vrot.lane.b32.xlu0 %v1271, 96
    %v1274 = vpop.permute.xlu0 %1273
    %v1275 = vrot.slane %v1274, 2
    %v1276 = vsel %vm231, %v1274, %v1275
    %v1278 = vadd.f32 %v1268, %v1276
    %s1279 = sld [smem:[#allocation8 + $0x4c]]
    %v1280 = vld [vmem:[%s180 + $0x2] sm:$0x3f]
    %v1281 = vstv %s1279
    %v1282 = vmul.f32 %v1281, %v1280
    %1284 = vrot.lane.b32.xlu0 %v1282, 80
    %v1285 = vpop.permute.xlu0 %1284
    %v1286 = vrot.slane %v1285, 6
    %v1287 = vsel %vm242, %v1286, %v1285
    %v1289 = vadd.f32 %v1278, %v1287
    %s1290 = sld [smem:[#allocation8 + $0x53]]
    %v1291 = vstv %s1290
    %v1292 = vmul.f32 %v1291, %v1280
    %1294 = vrot.lane.b32.xlu0 %v1292, 64
    %v1295 = vpop.permute.xlu0 %1294
    %v1296 = vrot.slane %v1295, 6
    %v1297 = vsel %vm254, %v1296, %v1295
    %v1299 = vadd.f32 %v1289, %v1297
    %s1300 = sld [smem:[#allocation8 + $0x5a]]
    %v1301 = vstv %s1300
    %v1302 = vmul.f32 %v1301, %v1280
    %1304 = vrot.lane.b32.xlu0 %v1302, 48
    %v1305 = vpop.permute.xlu0 %1304
    %v1306 = vrot.slane %v1305, 6
    %v1307 = vsel %vm265, %v1306, %v1305
    %v1309 = vadd.f32 %v1299, %v1307
    %s1310 = sld [smem:[#allocation8 + $0x61]]
    %v1311 = vstv %s1310
    %v1312 = vmul.f32 %v1311, %v1280
    %1314 = vrot.lane.b32.xlu0 %v1312, 32
    %v1315 = vpop.permute.xlu0 %1314
    %v1316 = vrot.slane %v1315, 6
    %v1317 = vsel %vm276, %v1316, %v1315
    %v1319 = vadd.f32 %v1309, %v1317
    %v1320 = vadd.s32 %v207, 3
    %v1321 = vadd.s32 %v208, 3
    %vm1322 = vcmp.ge.s32.totalorder %v1320, 0
    %vm1323 = vcmp.ge.s32.totalorder %v1321, 0
    %vm1324 = vcmp.lt.s32.totalorder %v1320, 16
    %vm1325 = vcmp.lt.s32.totalorder %v1321, 16
    %vm1326 = vmand %vm1322, %vm1324
    %vm1327 = vmand %vm1323, %vm1325
    %v1329 = vcombine.high %v1319, %v1319
    %v1331 = vunpack.c.l.s4 1983009808
    %v1332 = vunpack.c.0.s8 %v1331
    %v1333 = vlaneseq
    %v1334 = vshrl.u32 %v1333, 7
    %v1335 = vsub.s32 %v1332, %v1334
    %v1336 = vrot.slane %v1319, %v1335
    %v1338 = vunpack.c.l.s4 1983009808
    %v1339 = vunpack.c.0.s8 %v1338
    %v1340 = vlaneseq
    %v1341 = vshrl.u32 %v1340, 7
    %v1342 = vsub.s32 %v1339, %v1341
    %v1343 = vrot.slane %v1329, %v1342
    %v1344 = vcombine.high %v1336, %v1336
    %1345 = vrot.lane.b32.xlu0 %v1336, 45
    %v1346 = vpop.permute.xlu0 %1345
    %1347 = vrot.lane.b32.xlu0 %v1344, 45
    %v1348 = vpop.permute.xlu0 %1347
    %1349 = vrot.lane.b32.xlu0 %v1343, 45
    %v1350 = vpop.permute.xlu0 %1349
    %vm1351 = vcmask 367616
    %v1352 = vsel %vm1351, %v1346, %v1348
    %v1353 = vsel %vm1351, %v1348, %v1350
    %v1356 = vsel %vm1326, %v1352, 0.0
    %v1357 = vsel %vm1327, %v1353, 0.0
    %v1358 = vadd.f32 %v382, %v551
    %v1359 = vadd.f32 %v383, %v552
    %v1360 = vadd.f32 %v1358, %v720
    %v1361 = vadd.f32 %v1359, %v721
    %v1363 = vcombine.high %v854, %v854
    %v1365 = vunpack.c.l.s4 1983009808
    %v1366 = vunpack.c.0.s8 %v1365
    %v1367 = vlaneseq
    %v1368 = vshrl.u32 %v1367, 7
    %v1369 = vsub.s32 %v1366, %v1368
    %v1370 = vrot.slane %v854, %v1369
    %v1372 = vunpack.c.l.s4 1983009808
    %v1373 = vunpack.c.0.s8 %v1372
    %v1374 = vlaneseq
    %v1375 = vshrl.u32 %v1374, 7
    %v1376 = vsub.s32 %v1373, %v1375
    %v1377 = vrot.slane %v1363, %v1376
    %v1378 = vcombine.high %v1370, %v1370
    %1379 = vrot.lane.b32.xlu0 %v1370, 48
    %v1380 = vpop.permute.xlu0 %1379
    %1381 = vrot.lane.b32.xlu0 %v1378, 48
    %v1382 = vpop.permute.xlu0 %1381
    %1383 = vrot.lane.b32.xlu0 %v1377, 48
    %v1384 = vpop.permute.xlu0 %1383
    %v1385 = vsel %vm265, %v1380, %v1382
    %v1386 = vsel %vm265, %v1382, %v1384
    %v1389 = vadd.f32 %v1360, %v1385
    %v1390 = vadd.f32 %v1361, %v1386
    %v1391 = vadd.f32 %v1389, %v1018
    %v1392 = vadd.f32 %v1390, %v1019
    %v1393 = vadd.f32 %v1391, %v1187
    %v1394 = vadd.f32 %v1392, %v1188
    %v1395 = vadd.f32 %v1393, %v1356
    %v1396 = vadd.f32 %v1394, %v1357
    %s1397 = sld [smem:[#allocation3]]
    %v1398 = vstv %s1397
    %v1399 = vadd.f32 %v1395, %v1398
    %v1400 = vadd.f32 %v1396, %v1398
    %v1401 = vxor.u32 %v1399, 2147483648
    %v1402 = vxor.u32 %v1400, 2147483648
    %v1403 = vmul.f32 %v1401, 1.442695
    %v1404 = vpow.pop %v1403
    %v1405 = vmul.f32 %v1402, 1.442695
    %v1406 = vpow.pop %v1405
    %v1407 = vadd.f32 %v1404, 1.0
    %v1408 = vadd.f32 %v1406, 1.0
    %v1409 = vrcp.pop %v1407
    %v1410 = vmul.f32 1.0, %v1409
    %v1411 = vrcp.pop %v1408
    %v1412 = vmul.f32 1.0, %v1411
    %v1415 = vcombine.low %v1410, %v1412
    %v1417 = vunpack.c.l.s4 1966171168
    %v1418 = vunpack.c.0.s8 %v1417
    %v1419 = vlaneseq
    %v1420 = vshrl.u32 %v1419, 7
    %v1421 = vsub.s32 %v1418, %v1420
    %v1422 = vrot.slane %v1415, %v1421
    %v1423 = vcombine.high %v1422, %v1422
    %v1425 = vunpack.c.l.s4 1966171168
    %v1426 = vunpack.c.0.s8 %v1425
    %v1427 = vlaneseq
    %v1428 = vshrl.u32 %v1427, 7
    %v1429 = vsub.s32 %v1426, %v1428
    %v1430 = vrot.slane %v1422, %v1429
    %v1432 = vunpack.c.l.s4 1966171168
    %v1433 = vunpack.c.0.s8 %v1432
    %v1434 = vlaneseq
    %v1435 = vshrl.u32 %v1434, 7
    %v1436 = vsub.s32 %v1433, %v1435
    %v1437 = vrot.slane %v1423, %v1436
    %v1438 = vlaneseq
    %v1439 = vshrl.u32 %v1438, 7
    %v1440 = vsub.s32 0, %v1439
    %v1441 = vrot.slane %v1430, %v1440
    %v1442 = vlaneseq
    %v1443 = vshrl.u32 %v1442, 7
    %v1444 = vsub.s32 1, %v1443
    %v1445 = vrot.slane %v1430, %v1444
    %v1446 = vlaneseq
    %v1447 = vshrl.u32 %v1446, 7
    %v1448 = vsub.s32 0, %v1447
    %v1449 = vrot.slane %v1437, %v1448
    %v1450 = vlaneseq
    %v1451 = vshrl.u32 %v1450, 7
    %v1452 = vsub.s32 1, %v1451
    %v1453 = vrot.slane %v1437, %v1452
    %v1454 = vcombine.low %v1441, %v1445
    %v1455 = vcombine.low %v1449, %v1453
    %v1458 = vmul.f32 %v43, %v1454
    %v1459 = vmul.f32 %v44, %v1455
    %1460 = vst [vmem:[#allocation9] sm:$0xff] %v1458
    %1461 = vst [vmem:[#allocation9 + $0x8] sm:$0xff] %v1459
    // Predicated region
    $region22: #{tpu_custom_call.1} parent=1 // pred_check
      _
    $region23: #{tpu_custom_call.1} parent=1 // pred_check_branch
      %1463 = sbr.rel (0) target = $region25
    $region24: #{tpu_custom_call.1} parent=1 // pred_region
      %s1465 = ssub.s32 256, 256
      %1466 = vsyncadd [#allocation6], %s1465
      %s1467 = sshll.u32 [#allocation9], 4
      %s1468 = int_to_ptr.vmem [resolvable:$true] %s1467
      %1473 = dma.vmem_to_hbm [thread:$0]  %s1468, 256, %s3, [#allocation6], 128, 128, 8
    $region25: #{tpu_custom_call.1} parent=1 // pred_fallthru
      _
    // Predicated region
    $region26: #{tpu_custom_call.1} parent=1 // pred_check
      _
    $region27: #{tpu_custom_call.1} parent=1 // pred_check_branch
      %1475 = sbr.rel (0) target = $region29
    $region28: #{tpu_custom_call.1} parent=1 // pred_region
      %1476 = dma.done [#allocation6], 256
    $region29: #{tpu_custom_call.1} parent=1 // pred_fallthru
      _
    %1477 = vsyncpa [#allocation5], 1
    %1478 = vsyncpa [#allocation6], 1
    %1479 = vsyncpa [#allocation7], 1

</llo_original>
